<compile_context>
chip_gen: v6e
topology: v6e:2x2x1
jax: 0.10.0
libtpu: 0.0.40
codegen_flags: <defaults>
</compile_context>

<pallas_src>
import jax
import jax.numpy as jnp
import numpy as np
from jax.experimental import pallas as pl
from jax.experimental.pallas import tpu as pltpu

# ----------------------------- config -------------------------------------
B, C_IN, H, W = 2, 4, 16, 16
K = 3                       # conv kernel size, padding 1
C_OUT = 256                 # backbone feature dim (== projection input_dim)
HID = 512                   # projection hidden_dim
OUT = 512                   # projection output_dim
CK = C_IN * K * K           # im2col patch width = 36
HW = H * W                  # 256
BN_EPS = 1e-5


# ----------------------------- glue: im2col -------------------------------
def extract_patches(x_nchw):
    """(B, C, H, W) -> (B*H*W, C*K*K) via one fused XLA patch-extraction op.

    Patch channel order is (c, kh, kw); the conv weight `wc` is stored
    pre-flattened in the same basis, so ordering is consistent by construction.
    """
    p = jax.lax.conv_general_dilated_patches(
        x_nchw, filter_shape=(K, K), window_strides=(1, 1),
        padding=((1, 1), (1, 1)))                      # (B, C*K*K, H, W)
    p = jnp.transpose(p, (0, 2, 3, 1))                 # (B, H, W, C*K*K)
    return p.reshape(B * HW, CK)


# ----------------------- fused kernel: backbone + head ---------------------
def vicreg_kernel(patches_ref, wc_ref, bc_ref, w1_ref, gamma_ref, beta_ref,
                  w2_ref, b2_ref, feats_ref, z_ref):
    # ---- backbone: conv-as-matmul (bf16 x bf16 -> f32 acc) + bias + ReLU ----
    conv = jnp.dot(patches_ref[...], wc_ref[...],
                   preferred_element_type=jnp.float32)        # (B*HW, C_OUT)
    conv = jnp.maximum(conv + bc_ref[...], 0.0)

    # ---- global average pool: scaled sum per batch row ----------------------
    conv3 = conv.reshape(B, HW, C_OUT)
    feats = jnp.sum(conv3, axis=1) * (1.0 / HW)                # (B, C_OUT) f32
    feats_ref[...] = feats                                     # lane-dense store

    # ---- projection head: Linear -> BN(batch stats) -> ReLU -> Linear -------
    h = jnp.dot(feats.astype(jnp.bfloat16), w1_ref[...],
                preferred_element_type=jnp.float32)            # (B, HID)
    mean = jnp.mean(h, axis=0, keepdims=True)
    var = jnp.mean((h - mean) * (h - mean), axis=0, keepdims=True)
    hn = (h - mean) * jax.lax.rsqrt(var + BN_EPS)
    hn = hn * gamma_ref[...] + beta_ref[...]
    hn = jnp.maximum(hn, 0.0)                                  # ReLU
    z_ref[...] = jnp.dot(hn.astype(jnp.bfloat16), w2_ref[...],
                         preferred_element_type=jnp.float32) + b2_ref[...]


# ----------------------------- full forward --------------------------------
@jax.jit
def vicreg_forward(x_nchw, params):
    patches = extract_patches(x_nchw).astype(jnp.bfloat16)     # (B*HW, CK)
    feats, z = pl.pallas_call(
        vicreg_kernel,
        out_shape=(jax.ShapeDtypeStruct((B, C_OUT), jnp.float32),
                   jax.ShapeDtypeStruct((B, OUT), jnp.float32)),
        grid=(1,),
        in_specs=[
            pl.BlockSpec((B * HW, CK), lambda i: (0, 0)),
            pl.BlockSpec((CK, C_OUT), lambda i: (0, 0)),
            pl.BlockSpec((1, C_OUT), lambda i: (0, 0)),
            pl.BlockSpec((C_OUT, HID), lambda i: (0, 0)),
            pl.BlockSpec((1, HID), lambda i: (0, 0)),
            pl.BlockSpec((1, HID), lambda i: (0, 0)),
            pl.BlockSpec((HID, OUT), lambda i: (0, 0)),
            pl.BlockSpec((1, OUT), lambda i: (0, 0)),
        ],
        out_specs=[
            pl.BlockSpec((B, C_OUT), lambda i: (0, 0)),
            pl.BlockSpec((B, OUT), lambda i: (0, 0)),
        ],
        compiler_params=pltpu.CompilerParams(
            dimension_semantics=("arbitrary",)),
    )(patches, params["wc"], params["bc"], params["w1"], params["gamma"],
      params["beta"], params["w2"], params["b2"])
    return feats, z


# ----------------------------- reference ----------------------------------
def vicreg_reference(x_nchw, params):
    patches = extract_patches(x_nchw).astype(jnp.bfloat16)
    conv = jnp.dot(patches, params["wc"], preferred_element_type=jnp.float32)
    conv = jnp.maximum(conv + params["bc"], 0.0)
    feats = conv.reshape(B, HW, C_OUT).mean(axis=1)
    h = jnp.dot(feats.astype(jnp.bfloat16), params["w1"],
                preferred_element_type=jnp.float32)
    mean = h.mean(axis=0, keepdims=True)
    var = ((h - mean) ** 2).mean(axis=0, keepdims=True)
    hn = (h - mean) / jnp.sqrt(var + BN_EPS)
    hn = jnp.maximum(hn * params["gamma"] + params["beta"], 0.0)
    z = jnp.dot(hn.astype(jnp.bfloat16), params["w2"],
                preferred_element_type=jnp.float32) + params["b2"]
    return feats, z


# ----------------------------- main ----------------------------------------
if __name__ == "__main__":
    key = jax.random.PRNGKey(0)
    kx, kc, kb, k1, k2, kb2 = jax.random.split(key, 6)

    x = jax.random.normal(kx, (B, C_IN, H, W), dtype=jnp.float32)

    params = {
        # conv weight stored pre-flattened as (kH*kW*Cin, Cout) to match patches
        "wc": (0.05 * jax.random.normal(kc, (CK, C_OUT),
                                        jnp.float32)).astype(jnp.bfloat16),
        "bc": 0.05 * jax.random.normal(kb, (1, C_OUT), jnp.float32),
        # Linear(256,512, bias=False) — bf16 storage, f32 accumulation
        "w1": (0.05 * jax.random.normal(k1, (C_OUT, HID),
                                        jnp.float32)).astype(jnp.bfloat16),
        # BatchNorm1d(512) affine params (PyTorch default init: gamma=1, beta=0)
        "gamma": jnp.ones((1, HID), dtype=jnp.float32),
        "beta": jnp.zeros((1, HID), dtype=jnp.float32),
        # Linear(512,512, bias=True) — bf16 storage, f32 accumulation
        "w2": (0.05 * jax.random.normal(k2, (HID, OUT),
                                        jnp.float32)).astype(jnp.bfloat16),
        "b2": 0.05 * jax.random.normal(kb2, (1, OUT), jnp.float32),
    }

    feats, z = vicreg_forward(x, params)
    jax.block_until_ready((feats, z))

    feats_ref, z_ref = vicreg_reference(x, params)
    assert feats.shape == (B, C_OUT) and z.shape == (B, OUT)
    np.testing.assert_allclose(np.asarray(feats), np.asarray(feats_ref),
                               rtol=1e-3, atol=1e-3)
    np.testing.assert_allclose(np.asarray(z), np.asarray(z_ref),
                               rtol=1e-3, atol=1e-3)

    print("KERNEL_OK")
</pallas_src>

<mosaic_0001>
module attributes {stable_mosaic.version = 11 : i64} {
  func.func @vicreg_kernel(%arg0: i32, %arg1: memref<512x36xbf16, #tpu.memory_space<vmem>>, %arg2: memref<36x256xbf16, #tpu.memory_space<vmem>>, %arg3: memref<1x256xf32, #tpu.memory_space<vmem>>, %arg4: memref<256x512xbf16, #tpu.memory_space<vmem>>, %arg5: memref<1x512xf32, #tpu.memory_space<vmem>>, %arg6: memref<1x512xf32, #tpu.memory_space<vmem>>, %arg7: memref<512x512xbf16, #tpu.memory_space<vmem>>, %arg8: memref<1x512xf32, #tpu.memory_space<vmem>>, %arg9: memref<2x256xf32, #tpu.memory_space<vmem>>, %arg10: memref<2x512xf32, #tpu.memory_space<vmem>>) attributes {dimension_semantics = [#tpu.dimension_semantics<arbitrary>], iteration_bounds = array<i64: 1>, scalar_prefetch = 0 : i64, scratch_operands = 0 : i64, tpu.core_type = #tpu.core_type<tc>, window_params = [{pipeline_mode = #tpu.pipeline_mode<synchronous>, transform_indices = @transform_0, window_bounds = array<i64: 512, 36>}, {pipeline_mode = #tpu.pipeline_mode<synchronous>, transform_indices = @transform_1, window_bounds = array<i64: 36, 256>}, {pipeline_mode = #tpu.pipeline_mode<synchronous>, transform_indices = @transform_2, window_bounds = array<i64: 1, 256>}, {pipeline_mode = #tpu.pipeline_mode<synchronous>, transform_indices = @transform_3, window_bounds = array<i64: 256, 512>}, {pipeline_mode = #tpu.pipeline_mode<synchronous>, transform_indices = @transform_4, window_bounds = array<i64: 1, 512>}, {pipeline_mode = #tpu.pipeline_mode<synchronous>, transform_indices = @transform_5, window_bounds = array<i64: 1, 512>}, {pipeline_mode = #tpu.pipeline_mode<synchronous>, transform_indices = @transform_6, window_bounds = array<i64: 512, 512>}, {pipeline_mode = #tpu.pipeline_mode<synchronous>, transform_indices = @transform_7, window_bounds = array<i64: 1, 512>}, {pipeline_mode = #tpu.pipeline_mode<synchronous>, transform_indices = @transform_8, window_bounds = array<i64: 2, 256>}, {pipeline_mode = #tpu.pipeline_mode<synchronous>, transform_indices = @transform_9, window_bounds = array<i64: 2, 512>}]} {
    %c0 = arith.constant 0 : index
    %c0_0 = arith.constant 0 : index
    %0 = vector.load %arg1[%c0, %c0_0] : memref<512x36xbf16, #tpu.memory_space<vmem>>, vector<512x36xbf16>
    %c0_1 = arith.constant 0 : index
    %c0_2 = arith.constant 0 : index
    %1 = vector.load %arg2[%c0_1, %c0_2] : memref<36x256xbf16, #tpu.memory_space<vmem>>, vector<36x256xbf16>
    %cst = arith.constant dense<0.000000e+00> : vector<512x256xf32>
    %2 = tpu.matmul %0, %1, %cst {dimension_numbers = #tpu.dot_dimension_numbers<[1], [0], [0], [1], [0, 0, 1, 1], [], []>} : vector<512x36xbf16>, vector<36x256xbf16>, vector<512x256xf32> -> vector<512x256xf32>
    %c0_3 = arith.constant 0 : index
    %c0_4 = arith.constant 0 : index
    %3 = vector.load %arg3[%c0_3, %c0_4] : memref<1x256xf32, #tpu.memory_space<vmem>>, vector<1x256xf32>
    %4 = vector.broadcast %3 : vector<1x256xf32> to vector<512x256xf32>
    %5 = arith.addf %2, %4 : vector<512x256xf32>
    %cst_5 = arith.constant 0.000000e+00 : f32
    %6 = vector.broadcast %cst_5 : f32 to vector<512x256xf32>
    %7 = arith.maximumf %5, %6 : vector<512x256xf32>
    %8 = vector.shape_cast %7 : vector<512x256xf32> to vector<2x256x256xf32>
    %cst_6 = arith.constant dense<0.000000e+00> : vector<2x256xf32>
    %9 = vector.multi_reduction <add>, %8, %cst_6 [1] : vector<2x256x256xf32> to vector<2x256xf32>
    %cst_7 = arith.constant 3.906250e-03 : f32
    %10 = vector.broadcast %cst_7 : f32 to vector<2x256xf32>
    %11 = arith.mulf %9, %10 : vector<2x256xf32>
    %c0_8 = arith.constant 0 : index
    %c0_9 = arith.constant 0 : index
    %12 = vector.load %arg9[%c0_8, %c0_9] : memref<2x256xf32, #tpu.memory_space<vmem>>, vector<2x256xf32>
    tpu.vector_store %arg9[%c0_8, %c0_9], %11 {strides = array<i32>} : memref<2x256xf32, #tpu.memory_space<vmem>>, vector<2x256xf32>,
    %13 = arith.truncf %11 : vector<2x256xf32> to vector<2x256xbf16>
    %c0_10 = arith.constant 0 : index
    %c0_11 = arith.constant 0 : index
    %14 = vector.load %arg4[%c0_10, %c0_11] : memref<256x512xbf16, #tpu.memory_space<vmem>>, vector<256x512xbf16>
    %cst_12 = arith.constant dense<0.000000e+00> : vector<2x512xf32>
    %15 = tpu.matmul %13, %14, %cst_12 {dimension_numbers = #tpu.dot_dimension_numbers<[1], [0], [0], [1], [0, 0, 1, 1], [], []>} : vector<2x256xbf16>, vector<256x512xbf16>, vector<2x512xf32> -> vector<2x512xf32>
    %cst_13 = arith.constant dense<0.000000e+00> : vector<512xf32>
    %16 = vector.multi_reduction <add>, %15, %cst_13 [0] : vector<2x512xf32> to vector<512xf32>
    %17 = vector.shape_cast %16 : vector<512xf32> to vector<1x512xf32>
    %cst_14 = arith.constant 2.000000e+00 : f32
    %18 = vector.broadcast %cst_14 : f32 to vector<1x512xf32>
    %19 = arith.divf %17, %18 : vector<1x512xf32>
    %20 = vector.broadcast %19 : vector<1x512xf32> to vector<2x512xf32>
    %21 = arith.subf %15, %20 : vector<2x512xf32>
    %22 = vector.broadcast %19 : vector<1x512xf32> to vector<2x512xf32>
    %23 = arith.subf %15, %22 : vector<2x512xf32>
    %24 = arith.mulf %21, %23 : vector<2x512xf32>
    %cst_15 = arith.constant dense<0.000000e+00> : vector<512xf32>
    %25 = vector.multi_reduction <add>, %24, %cst_15 [0] : vector<2x512xf32> to vector<512xf32>
    %26 = vector.shape_cast %25 : vector<512xf32> to vector<1x512xf32>
    %cst_16 = arith.constant 2.000000e+00 : f32
    %27 = vector.broadcast %cst_16 : f32 to vector<1x512xf32>
    %28 = arith.divf %26, %27 : vector<1x512xf32>
    %29 = vector.broadcast %19 : vector<1x512xf32> to vector<2x512xf32>
    %30 = arith.subf %15, %29 : vector<2x512xf32>
    %cst_17 = arith.constant 9.99999974E-6 : f32
    %31 = vector.broadcast %cst_17 : f32 to vector<1x512xf32>
    %32 = arith.addf %28, %31 : vector<1x512xf32>
    %33 = math.rsqrt %32 : vector<1x512xf32>
    %34 = vector.broadcast %33 : vector<1x512xf32> to vector<2x512xf32>
    %35 = arith.mulf %30, %34 : vector<2x512xf32>
    %c0_18 = arith.constant 0 : index
    %c0_19 = arith.constant 0 : index
    %36 = vector.load %arg5[%c0_18, %c0_19] : memref<1x512xf32, #tpu.memory_space<vmem>>, vector<1x512xf32>
    %37 = vector.broadcast %36 : vector<1x512xf32> to vector<2x512xf32>
    %38 = arith.mulf %35, %37 : vector<2x512xf32>
    %c0_20 = arith.constant 0 : index
    %c0_21 = arith.constant 0 : index
    %39 = vector.load %arg6[%c0_20, %c0_21] : memref<1x512xf32, #tpu.memory_space<vmem>>, vector<1x512xf32>
    %40 = vector.broadcast %39 : vector<1x512xf32> to vector<2x512xf32>
    %41 = arith.addf %38, %40 : vector<2x512xf32>
    %cst_22 = arith.constant 0.000000e+00 : f32
    %42 = vector.broadcast %cst_22 : f32 to vector<2x512xf32>
    %43 = arith.maximumf %41, %42 : vector<2x512xf32>
    %44 = arith.truncf %43 : vector<2x512xf32> to vector<2x512xbf16>
    %c0_23 = arith.constant 0 : index
    %c0_24 = arith.constant 0 : index
    %45 = vector.load %arg7[%c0_23, %c0_24] : memref<512x512xbf16, #tpu.memory_space<vmem>>, vector<512x512xbf16>
    %cst_25 = arith.constant dense<0.000000e+00> : vector<2x512xf32>
    %46 = tpu.matmul %44, %45, %cst_25 {dimension_numbers = #tpu.dot_dimension_numbers<[1], [0], [0], [1], [0, 0, 1, 1], [], []>} : vector<2x512xbf16>, vector<512x512xbf16>, vector<2x512xf32> -> vector<2x512xf32>
    %c0_26 = arith.constant 0 : index
    %c0_27 = arith.constant 0 : index
    %47 = vector.load %arg8[%c0_26, %c0_27] : memref<1x512xf32, #tpu.memory_space<vmem>>, vector<1x512xf32>
    %48 = vector.broadcast %47 : vector<1x512xf32> to vector<2x512xf32>
    %49 = arith.addf %46, %48 : vector<2x512xf32>
    %c0_28 = arith.constant 0 : index
    %c0_29 = arith.constant 0 : index
    %50 = vector.load %arg10[%c0_28, %c0_29] : memref<2x512xf32, #tpu.memory_space<vmem>>, vector<2x512xf32>
    tpu.vector_store %arg10[%c0_28, %c0_29], %49 {strides = array<i32>} : memref<2x512xf32, #tpu.memory_space<vmem>>, vector<2x512xf32>,
    return
  }
  func.func @transform_0(%arg0: i32) -> (i32, i32) {
    %c0_i32 = arith.constant 0 : i32
    %c0_i32_0 = arith.constant 0 : i32
    %c0_i32_1 = arith.constant 0 : i32
    return %c0_i32, %c0_i32_0 : i32, i32
  }
  func.func @transform_1(%arg0: i32) -> (i32, i32) {
    %c0_i32 = arith.constant 0 : i32
    %c0_i32_0 = arith.constant 0 : i32
    %c0_i32_1 = arith.constant 0 : i32
    return %c0_i32, %c0_i32_0 : i32, i32
  }
  func.func @transform_2(%arg0: i32) -> (i32, i32) {
    %c0_i32 = arith.constant 0 : i32
    %c0_i32_0 = arith.constant 0 : i32
    %c0_i32_1 = arith.constant 0 : i32
    return %c0_i32, %c0_i32_0 : i32, i32
  }
  func.func @transform_3(%arg0: i32) -> (i32, i32) {
    %c0_i32 = arith.constant 0 : i32
    %c0_i32_0 = arith.constant 0 : i32
    %c0_i32_1 = arith.constant 0 : i32
    return %c0_i32, %c0_i32_0 : i32, i32
  }
  func.func @transform_4(%arg0: i32) -> (i32, i32) {
    %c0_i32 = arith.constant 0 : i32
    %c0_i32_0 = arith.constant 0 : i32
    %c0_i32_1 = arith.constant 0 : i32
    return %c0_i32, %c0_i32_0 : i32, i32
  }
  func.func @transform_5(%arg0: i32) -> (i32, i32) {
    %c0_i32 = arith.constant 0 : i32
    %c0_i32_0 = arith.constant 0 : i32
    %c0_i32_1 = arith.constant 0 : i32
    return %c0_i32, %c0_i32_0 : i32, i32
  }
  func.func @transform_6(%arg0: i32) -> (i32, i32) {
    %c0_i32 = arith.constant 0 : i32
    %c0_i32_0 = arith.constant 0 : i32
    %c0_i32_1 = arith.constant 0 : i32
    return %c0_i32, %c0_i32_0 : i32, i32
  }
  func.func @transform_7(%arg0: i32) -> (i32, i32) {
    %c0_i32 = arith.constant 0 : i32
    %c0_i32_0 = arith.constant 0 : i32
    %c0_i32_1 = arith.constant 0 : i32
    return %c0_i32, %c0_i32_0 : i32, i32
  }
  func.func @transform_8(%arg0: i32) -> (i32, i32) {
    %c0_i32 = arith.constant 0 : i32
    %c0_i32_0 = arith.constant 0 : i32
    %c0_i32_1 = arith.constant 0 : i32
    return %c0_i32, %c0_i32_0 : i32, i32
  }
  func.func @transform_9(%arg0: i32) -> (i32, i32) {
    %c0_i32 = arith.constant 0 : i32
    %c0_i32_0 = arith.constant 0 : i32
    %c0_i32_1 = arith.constant 0 : i32
    return %c0_i32, %c0_i32_0 : i32, i32
  }
}

</mosaic_0001>

<llo_original>
// kernel: vicreg_forward.1
$region0: #{vicreg_forward.1}
  #allocation0 [shape = 'u32[]', space=smem, size = 0x4, offset = 0x4, fixed_abs, tag = 'smem constant byte address 0x4 - core index']
  #allocation1 [shape = 'u32[144,128]{1,0:T(1,128)}', space=vmem, size = 0x12000, scoped, tag = 'internal scratch']
  %s0 = inlined_call_operand.vmem [shape: bf16[512,36], index: 0, kind: input, shape index: {}]
  %s1 = inlined_call_operand.vmem [shape: bf16[36,256], index: 1, kind: input, shape index: {}]
  %s2 = inlined_call_operand.vmem [shape: f32[1,256], index: 2, kind: input, shape index: {}]
  %s3 = inlined_call_operand.vmem [shape: bf16[256,512], index: 3, kind: input, shape index: {}]
  %s4 = inlined_call_operand.vmem [shape: f32[1,512], index: 4, kind: input, shape index: {}]
  %s5 = inlined_call_operand.vmem [shape: f32[1,512], index: 5, kind: input, shape index: {}]
  %s6 = inlined_call_operand.vmem [shape: bf16[512,512], index: 6, kind: input, shape index: {}]
  %s7 = inlined_call_operand.vmem [shape: f32[1,512], index: 7, kind: input, shape index: {}]
  %s8 = inlined_call_operand.hbm [shape: f32[2,256], index: 8, kind: output, shape index: {0}]
  %s9 = inlined_call_operand.hbm [shape: f32[2,512], index: 9, kind: output, shape index: {1}]
  %10 = xla_tuple %s8, %s9
  %s11 = sld [smem:[#allocation0]]
  $region50: #{vicreg_forward.1} parent=0
    _
  %s13 = ssub.s32 1, %s11
  %s14 = scalar_select 0, %s13, %s11
  $region1: #{vicreg_forward.1} parent=0
    #allocation2 [shape = 'u8[2048]{0}', space=vmem, size = 0x800, scoped, tag = 'output window, operand 0, single buffered']
    #allocation3 [shape = 's32[1]{0}', space=sflag, size = 0x4, scoped, tag = 'scoped memory for vicreg_forward.1']
    #allocation4 [shape = 'u8[4096]{0}', space=vmem, size = 0x1000, scoped, tag = 'output window, operand 1, single buffered']
    #allocation5 [shape = 's32[1]{0}', space=sflag, size = 0x4, scoped, tag = 'scoped memory for vicreg_forward.1']
    %15 = vsyncpa [#allocation3], 0
    %16 = vsyncpa [#allocation5], 0
    // Predicated region
    $region2: #{vicreg_forward.1} parent=1 // pred_check
      _
    $region3: #{vicreg_forward.1} parent=1 // pred_check_branch
      %18 = sbr.rel (0) target = $region5
    $region4: #{vicreg_forward.1} parent=1 // pred_region
      _
    $region5: #{vicreg_forward.1} parent=1 // pred_fallthru
      _
    // Predicated region
    $region6: #{vicreg_forward.1} parent=1 // pred_check
      _
    $region7: #{vicreg_forward.1} parent=1 // pred_check_branch
      %20 = sbr.rel (0) target = $region9
    $region8: #{vicreg_forward.1} parent=1 // pred_region
      _
    $region9: #{vicreg_forward.1} parent=1 // pred_fallthru
      _
    // Predicated region
    $region10: #{vicreg_forward.1} parent=1 // pred_check
      _
    $region11: #{vicreg_forward.1} parent=1 // pred_check_branch
      %22 = sbr.rel (0) target = $region13
    $region12: #{vicreg_forward.1} parent=1 // pred_region
      _
    $region13: #{vicreg_forward.1} parent=1 // pred_fallthru
      _
    // Predicated region
    $region14: #{vicreg_forward.1} parent=1 // pred_check
      _
    $region15: #{vicreg_forward.1} parent=1 // pred_check_branch
      %24 = sbr.rel (0) target = $region17
    $region16: #{vicreg_forward.1} parent=1 // pred_region
      _
    $region17: #{vicreg_forward.1} parent=1 // pred_fallthru
      _
    // Predicated region
    $region18: #{vicreg_forward.1} parent=1 // pred_check
      _
    $region19: #{vicreg_forward.1} parent=1 // pred_check_branch
      %26 = sbr.rel (0) target = $region21
    $region20: #{vicreg_forward.1} parent=1 // pred_region
      _
    $region21: #{vicreg_forward.1} parent=1 // pred_fallthru
      _
    // Predicated region
    $region22: #{vicreg_forward.1} parent=1 // pred_check
      _
    $region23: #{vicreg_forward.1} parent=1 // pred_check_branch
      %28 = sbr.rel (0) target = $region25
    $region24: #{vicreg_forward.1} parent=1 // pred_region
      _
    $region25: #{vicreg_forward.1} parent=1 // pred_fallthru
      _
    // Predicated region
    $region26: #{vicreg_forward.1} parent=1 // pred_check
      _
    $region27: #{vicreg_forward.1} parent=1 // pred_check_branch
      %30 = sbr.rel (0) target = $region29
    $region28: #{vicreg_forward.1} parent=1 // pred_region
      _
    $region29: #{vicreg_forward.1} parent=1 // pred_fallthru
      _
    // Predicated region
    $region30: #{vicreg_forward.1} parent=1 // pred_check
      _
    $region31: #{vicreg_forward.1} parent=1 // pred_check_branch
      %32 = sbr.rel (0) target = $region33
    $region32: #{vicreg_forward.1} parent=1 // pred_region
      _
    $region33: #{vicreg_forward.1} parent=1 // pred_fallthru
      _
    %v34 = vld [vmem:[%s0] sm:$0xf]
    %v35 = vld [vmem:[%s0 + $0x4] sm:$0xf]
    %v36 = vld [vmem:[%s0 + $0x8] sm:$0xf]
    %v37 = vld [vmem:[%s0 + $0xc] sm:$0xf]
    %v38 = vld [vmem:[%s0 + $0x10] sm:$0xf]
    %v39 = vld [vmem:[%s0 + $0x14] sm:$0xf]
    %v40 = vld [vmem:[%s0 + $0x18] sm:$0xf]
    %v41 = vld [vmem:[%s0 + $0x1c] sm:$0xf]
    %v42 = vld [vmem:[%s0 + $0x20] sm:$0xf]
    %v43 = vld [vmem:[%s0 + $0x24] sm:$0xf]
    %v44 = vld [vmem:[%s0 + $0x28] sm:$0xf]
    %v45 = vld [vmem:[%s0 + $0x2c] sm:$0xf]
    %v46 = vld [vmem:[%s0 + $0x30] sm:$0xf]
    %v47 = vld [vmem:[%s0 + $0x34] sm:$0xf]
    %v48 = vld [vmem:[%s0 + $0x38] sm:$0xf]
    %v49 = vld [vmem:[%s0 + $0x3c] sm:$0xf]
    %v50 = vld [vmem:[%s0 + $0x40] sm:$0xf]
    %v51 = vld [vmem:[%s0 + $0x44] sm:$0xf]
    %v52 = vld [vmem:[%s0 + $0x48] sm:$0xf]
    %v53 = vld [vmem:[%s0 + $0x4c] sm:$0xf]
    %v54 = vld [vmem:[%s0 + $0x50] sm:$0xf]
    %v55 = vld [vmem:[%s0 + $0x54] sm:$0xf]
    %v56 = vld [vmem:[%s0 + $0x58] sm:$0xf]
    %v57 = vld [vmem:[%s0 + $0x5c] sm:$0xf]
    %v58 = vld [vmem:[%s0 + $0x60] sm:$0xf]
    %v59 = vld [vmem:[%s0 + $0x64] sm:$0xf]
    %v60 = vld [vmem:[%s0 + $0x68] sm:$0xf]
    %v61 = vld [vmem:[%s0 + $0x6c] sm:$0xf]
    %v62 = vld [vmem:[%s0 + $0x70] sm:$0xf]
    %v63 = vld [vmem:[%s0 + $0x74] sm:$0xf]
    %v64 = vld [vmem:[%s0 + $0x78] sm:$0xf]
    %v65 = vld [vmem:[%s0 + $0x7c] sm:$0xf]
    %v66 = vld [vmem:[%s0 + $0x80] sm:$0xf]
    %v67 = vld [vmem:[%s0 + $0x84] sm:$0xf]
    %v68 = vld [vmem:[%s0 + $0x88] sm:$0xf]
    %v69 = vld [vmem:[%s0 + $0x8c] sm:$0xf]
    %v70 = vld [vmem:[%s0 + $0x90] sm:$0xf]
    %v71 = vld [vmem:[%s0 + $0x94] sm:$0xf]
    %v72 = vld [vmem:[%s0 + $0x98] sm:$0xf]
    %v73 = vld [vmem:[%s0 + $0x9c] sm:$0xf]
    %v74 = vld [vmem:[%s0 + $0xa0] sm:$0xf]
    %v75 = vld [vmem:[%s0 + $0xa4] sm:$0xf]
    %v76 = vld [vmem:[%s0 + $0xa8] sm:$0xf]
    %v77 = vld [vmem:[%s0 + $0xac] sm:$0xf]
    %v78 = vld [vmem:[%s0 + $0xb0] sm:$0xf]
    %v79 = vld [vmem:[%s0 + $0xb4] sm:$0xf]
    %v80 = vld [vmem:[%s0 + $0xb8] sm:$0xf]
    %v81 = vld [vmem:[%s0 + $0xbc] sm:$0xf]
    %v82 = vld [vmem:[%s0 + $0xc0] sm:$0xf]
    %v83 = vld [vmem:[%s0 + $0xc4] sm:$0xf]
    %v84 = vld [vmem:[%s0 + $0xc8] sm:$0xf]
    %v85 = vld [vmem:[%s0 + $0xcc] sm:$0xf]
    %v86 = vld [vmem:[%s0 + $0xd0] sm:$0xf]
    %v87 = vld [vmem:[%s0 + $0xd4] sm:$0xf]
    %v88 = vld [vmem:[%s0 + $0xd8] sm:$0xf]
    %v89 = vld [vmem:[%s0 + $0xdc] sm:$0xf]
    %v90 = vld [vmem:[%s0 + $0xe0] sm:$0xf]
    %v91 = vld [vmem:[%s0 + $0xe4] sm:$0xf]
    %v92 = vld [vmem:[%s0 + $0xe8] sm:$0xf]
    %v93 = vld [vmem:[%s0 + $0xec] sm:$0xf]
    %v94 = vld [vmem:[%s0 + $0xf0] sm:$0xf]
    %v95 = vld [vmem:[%s0 + $0xf4] sm:$0xf]
    %v96 = vld [vmem:[%s0 + $0xf8] sm:$0xf]
    %v97 = vld [vmem:[%s0 + $0xfc] sm:$0xf]
    %v98 = vld [vmem:[%s1] sm:$0xff]
    %v99 = vld [vmem:[%s1 + $0x8] sm:$0xff]
    %v100 = vld [vmem:[%s1 + $0x10] sm:$0xff]
    %v101 = vld [vmem:[%s1 + $0x18] sm:$0xff]
    %v102 = vld [vmem:[%s1 + $0x20] sm:$0x33]
    %v103 = vld [vmem:[%s2] sm:$0x3]
    %v105 = vlaneseq
    %v106 = vshrl.u32 %v105, 7
    %v107 = vsub.s32 0, %v106
    %v108 = vrot.slane %v103, %v107
    %v109 = vlaneseq
    %v110 = vshrl.u32 %v109, 7
    %v111 = vsub.s32 1, %v110
    %v112 = vrot.slane %v103, %v111
    %v179 = vunpack.c.l.b16 %v34
    %v180 = vunpack.c.l.b16 %v35
    %v181 = vunpack.c.l.b16 %v36
    %v182 = vunpack.c.l.b16 %v37
    %v183 = vunpack.c.l.b16 %v38
    %v184 = vunpack.c.l.b16 %v39
    %v185 = vunpack.c.l.b16 %v40
    %v186 = vunpack.c.l.b16 %v41
    %v187 = vunpack.c.l.b16 %v42
    %v188 = vunpack.c.l.b16 %v43
    %v189 = vunpack.c.l.b16 %v44
    %v190 = vunpack.c.l.b16 %v45
    %v191 = vunpack.c.l.b16 %v46
    %v192 = vunpack.c.l.b16 %v47
    %v193 = vunpack.c.l.b16 %v48
    %v194 = vunpack.c.l.b16 %v49
    %v195 = vunpack.c.l.b16 %v50
    %v196 = vunpack.c.l.b16 %v51
    %v197 = vunpack.c.l.b16 %v52
    %v198 = vunpack.c.l.b16 %v53
    %v199 = vunpack.c.l.b16 %v54
    %v200 = vunpack.c.l.b16 %v55
    %v201 = vunpack.c.l.b16 %v56
    %v202 = vunpack.c.l.b16 %v57
    %v203 = vunpack.c.l.b16 %v58
    %v204 = vunpack.c.l.b16 %v59
    %v205 = vunpack.c.l.b16 %v60
    %v206 = vunpack.c.l.b16 %v61
    %v207 = vunpack.c.l.b16 %v62
    %v208 = vunpack.c.l.b16 %v63
    %v209 = vunpack.c.l.b16 %v64
    %v210 = vunpack.c.l.b16 %v65
    %v211 = vunpack.c.l.b16 %v66
    %v212 = vunpack.c.l.b16 %v67
    %v213 = vunpack.c.l.b16 %v68
    %v214 = vunpack.c.l.b16 %v69
    %v215 = vunpack.c.l.b16 %v70
    %v216 = vunpack.c.l.b16 %v71
    %v217 = vunpack.c.l.b16 %v72
    %v218 = vunpack.c.l.b16 %v73
    %v219 = vunpack.c.l.b16 %v74
    %v220 = vunpack.c.l.b16 %v75
    %v221 = vunpack.c.l.b16 %v76
    %v222 = vunpack.c.l.b16 %v77
    %v223 = vunpack.c.l.b16 %v78
    %v224 = vunpack.c.l.b16 %v79
    %v225 = vunpack.c.l.b16 %v80
    %v226 = vunpack.c.l.b16 %v81
    %v227 = vunpack.c.l.b16 %v82
    %v228 = vunpack.c.l.b16 %v83
    %v229 = vunpack.c.l.b16 %v84
    %v230 = vunpack.c.l.b16 %v85
    %v231 = vunpack.c.l.b16 %v86
    %v232 = vunpack.c.l.b16 %v87
    %v233 = vunpack.c.l.b16 %v88
    %v234 = vunpack.c.l.b16 %v89
    %v235 = vunpack.c.l.b16 %v90
    %v236 = vunpack.c.l.b16 %v91
    %v237 = vunpack.c.l.b16 %v92
    %v238 = vunpack.c.l.b16 %v93
    %v239 = vunpack.c.l.b16 %v94
    %v240 = vunpack.c.l.b16 %v95
    %v241 = vunpack.c.l.b16 %v96
    %v242 = vunpack.c.l.b16 %v97
    %v243 = vpack.c.b16 %v180, %v179
    %v244 = vpack.c.b16 %v182, %v181
    %v245 = vpack.c.b16 %v184, %v183
    %v246 = vpack.c.b16 %v186, %v185
    %v247 = vpack.c.b16 %v188, %v187
    %v248 = vpack.c.b16 %v190, %v189
    %v249 = vpack.c.b16 %v192, %v191
    %v250 = vpack.c.b16 %v194, %v193
    %v251 = vpack.c.b16 %v196, %v195
    %v252 = vpack.c.b16 %v198, %v197
    %v253 = vpack.c.b16 %v200, %v199
    %v254 = vpack.c.b16 %v202, %v201
    %v255 = vpack.c.b16 %v204, %v203
    %v256 = vpack.c.b16 %v206, %v205
    %v257 = vpack.c.b16 %v208, %v207
    %v258 = vpack.c.b16 %v210, %v209
    %v259 = vpack.c.b16 %v212, %v211
    %v260 = vpack.c.b16 %v214, %v213
    %v261 = vpack.c.b16 %v216, %v215
    %v262 = vpack.c.b16 %v218, %v217
    %v263 = vpack.c.b16 %v220, %v219
    %v264 = vpack.c.b16 %v222, %v221
    %v265 = vpack.c.b16 %v224, %v223
    %v266 = vpack.c.b16 %v226, %v225
    %v267 = vpack.c.b16 %v228, %v227
    %v268 = vpack.c.b16 %v230, %v229
    %v269 = vpack.c.b16 %v232, %v231
    %v270 = vpack.c.b16 %v234, %v233
    %v271 = vpack.c.b16 %v236, %v235
    %v272 = vpack.c.b16 %v238, %v237
    %v273 = vpack.c.b16 %v240, %v239
    %v274 = vpack.c.b16 %v242, %v241
    %v280 = vunpack.c.l.b16 %v98
    %v281 = vunpack.c.h.b16 %v98
    %v282 = vunpack.c.l.b16 %v99
    %v283 = vunpack.c.h.b16 %v99
    %v284 = vunpack.c.l.b16 %v100
    %v285 = vunpack.c.h.b16 %v100
    %v286 = vunpack.c.l.b16 %v101
    %v287 = vunpack.c.h.b16 %v101
    %v288 = vunpack.c.l.b16 %v102
    %v289 = vunpack.c.h.b16 %v102
    %v290 = vpack.c.b16 %v282, %v280
    %v291 = vpack.c.b16 %v283, %v281
    %v292 = vpack.c.b16 %v286, %v284
    %v293 = vpack.c.b16 %v287, %v285
    %v294 = vpack.c.b16 %v288, %v288
    %v295 = vpack.c.b16 %v289, %v289
    %vm300 = vcmask 293888
    %v302 = vsel %vm300, %v243, 0
    %v305 = vsel %vm300, %v244, 0
    %v308 = vsel %vm300, %v245, 0
    %v311 = vsel %vm300, %v246, 0
    %v314 = vsel %vm300, %v247, 0
    %v317 = vsel %vm300, %v248, 0
    %v320 = vsel %vm300, %v249, 0
    %v323 = vsel %vm300, %v250, 0
    %v326 = vsel %vm300, %v251, 0
    %v329 = vsel %vm300, %v252, 0
    %v332 = vsel %vm300, %v253, 0
    %v335 = vsel %vm300, %v254, 0
    %v338 = vsel %vm300, %v255, 0
    %v341 = vsel %vm300, %v256, 0
    %v344 = vsel %vm300, %v257, 0
    %v347 = vsel %vm300, %v258, 0
    %v350 = vsel %vm300, %v259, 0
    %v353 = vsel %vm300, %v260, 0
    %v356 = vsel %vm300, %v261, 0
    %v359 = vsel %vm300, %v262, 0
    %v362 = vsel %vm300, %v263, 0
    %v365 = vsel %vm300, %v264, 0
    %v368 = vsel %vm300, %v265, 0
    %v371 = vsel %vm300, %v266, 0
    %v374 = vsel %vm300, %v267, 0
    %v377 = vsel %vm300, %v268, 0
    %v380 = vsel %vm300, %v269, 0
    %v383 = vsel %vm300, %v270, 0
    %v386 = vsel %vm300, %v271, 0
    %v389 = vsel %vm300, %v272, 0
    %v392 = vsel %vm300, %v273, 0
    %v395 = vsel %vm300, %v274, 0
    %vm397 = vcmask 1041408
    %v399 = vsel %vm397, %v294, 0
    %v402 = vsel %vm397, %v295, 0
    %404 = vmatprep.subr.bf16.mxu0 0
    %405 = vmatpush1.bf16.msra.mxu0 0
    %406 = vmatprep.subr.bf16.mxu0 0
    %407 = vmatpush1.bf16.msra.mxu0 0
    %408 = vmatprep.subr.bf16.mxu0 0
    %409 = vmatpush1.bf16.msra.mxu0 0
    %410 = vmatprep.subr.bf16.mxu0 0
    %411 = vmatpush1.bf16.msra.mxu0 0
    %412 = vmatprep.subr.bf16.mxu0 0
    %413 = vmatpush1.bf16.msra.mxu0 0
    %414 = vmatprep.subr.bf16.mxu0 %v402
    %415 = vmatpush1.bf16.msra.mxu0 %v399
    %416 = vmatprep.subr.bf16.mxu0 %v293
    %417 = vmatpush1.bf16.msra.mxu0 %v292
    %418 = vmatprep.subr.bf16.mxu0 %v291
    %419 = vmatpush1.bf16.msra.mxu0 %v290
    %420 = vmatprep.subr.bf16.mxu0 0
    %421 = vmatpush2.bf16.msra.mxu0 0
    %422 = vmatprep.subr.bf16.mxu0 0
    %423 = vmatpush2.bf16.msra.mxu0 0
    %424 = vmatprep.subr.bf16.mxu0 0
    %425 = vmatpush2.bf16.msra.mxu0 0
    %426 = vmatprep.subr.bf16.mxu0 0
    %427 = vmatpush2.bf16.msra.mxu0 0
    %428 = vmatprep.subr.bf16.mxu0 0
    %429 = vmatpush2.bf16.msra.mxu0 0
    %430 = vmatprep.subr.bf16.mxu0 0
    %431 = vmatpush2.bf16.msra.mxu0 0
    %432 = vmatprep.subr.bf16.mxu0 0
    %433 = vmatpush2.bf16.msra.mxu0 0
    %434 = vmatprep.subr.bf16.mxu0 0
    %435 = vmatpush2.bf16.msra.mxu0 0
    %436 = vmatprep.mubr.bf16.mxu0 0
    %437 = vmatmul.mubr.bf16.gmra.mxu0 %v302
    %v438 = vpop.f32.mrf.mxu0
    %v439 = vadd.f32 %v108, %v438
    %v440 = vpop.f32.mrf.mxu0
    %v441 = vadd.f32 %v112, %v440
    %v442 = vpop.f32.mrf.mxu0
    %v443 = vadd.f32 %v108, %v442
    %v444 = vpop.f32.mrf.mxu0
    %v445 = vadd.f32 %v112, %v444
    %446 = vmatprep.mubr.bf16.mxu0 0
    %447 = vmatmul.mubr.bf16.gmra.mxu0 %v305
    %v448 = vpop.f32.mrf.mxu0
    %v449 = vadd.f32 %v108, %v448
    %v450 = vpop.f32.mrf.mxu0
    %v451 = vadd.f32 %v112, %v450
    %v452 = vpop.f32.mrf.mxu0
    %v453 = vadd.f32 %v108, %v452
    %v454 = vpop.f32.mrf.mxu0
    %v455 = vadd.f32 %v112, %v454
    %456 = vmatprep.mubr.bf16.mxu0 0
    %457 = vmatmul.mubr.bf16.gmra.mxu0 %v308
    %v458 = vpop.f32.mrf.mxu0
    %v459 = vadd.f32 %v108, %v458
    %v460 = vpop.f32.mrf.mxu0
    %v461 = vadd.f32 %v112, %v460
    %v462 = vpop.f32.mrf.mxu0
    %v463 = vadd.f32 %v108, %v462
    %v464 = vpop.f32.mrf.mxu0
    %v465 = vadd.f32 %v112, %v464
    %466 = vmatprep.mubr.bf16.mxu0 0
    %467 = vmatmul.mubr.bf16.gmra.mxu0 %v311
    %v468 = vpop.f32.mrf.mxu0
    %v469 = vadd.f32 %v108, %v468
    %v470 = vpop.f32.mrf.mxu0
    %v471 = vadd.f32 %v112, %v470
    %v472 = vpop.f32.mrf.mxu0
    %v473 = vadd.f32 %v108, %v472
    %v474 = vpop.f32.mrf.mxu0
    %v475 = vadd.f32 %v112, %v474
    %476 = vmatprep.mubr.bf16.mxu0 0
    %477 = vmatmul.mubr.bf16.gmra.mxu0 %v314
    %v478 = vpop.f32.mrf.mxu0
    %v479 = vadd.f32 %v108, %v478
    %v480 = vpop.f32.mrf.mxu0
    %v481 = vadd.f32 %v112, %v480
    %v482 = vpop.f32.mrf.mxu0
    %v483 = vadd.f32 %v108, %v482
    %v484 = vpop.f32.mrf.mxu0
    %v485 = vadd.f32 %v112, %v484
    %486 = vmatprep.mubr.bf16.mxu0 0
    %487 = vmatmul.mubr.bf16.gmra.mxu0 %v317
    %v488 = vpop.f32.mrf.mxu0
    %v489 = vadd.f32 %v108, %v488
    %v490 = vpop.f32.mrf.mxu0
    %v491 = vadd.f32 %v112, %v490
    %v492 = vpop.f32.mrf.mxu0
    %v493 = vadd.f32 %v108, %v492
    %v494 = vpop.f32.mrf.mxu0
    %v495 = vadd.f32 %v112, %v494
    %496 = vmatprep.mubr.bf16.mxu0 0
    %497 = vmatmul.mubr.bf16.gmra.mxu0 %v320
    %v498 = vpop.f32.mrf.mxu0
    %v499 = vadd.f32 %v108, %v498
    %v500 = vpop.f32.mrf.mxu0
    %v501 = vadd.f32 %v112, %v500
    %v502 = vpop.f32.mrf.mxu0
    %v503 = vadd.f32 %v108, %v502
    %v504 = vpop.f32.mrf.mxu0
    %v505 = vadd.f32 %v112, %v504
    %506 = vmatprep.mubr.bf16.mxu0 0
    %507 = vmatmul.mubr.bf16.gmra.mxu0 %v323
    %v508 = vpop.f32.mrf.mxu0
    %v509 = vadd.f32 %v108, %v508
    %v510 = vpop.f32.mrf.mxu0
    %v511 = vadd.f32 %v112, %v510
    %v512 = vpop.f32.mrf.mxu0
    %v513 = vadd.f32 %v108, %v512
    %v514 = vpop.f32.mrf.mxu0
    %v515 = vadd.f32 %v112, %v514
    %516 = vmatprep.mubr.bf16.mxu0 0
    %517 = vmatmul.mubr.bf16.gmra.mxu0 %v326
    %v518 = vpop.f32.mrf.mxu0
    %v519 = vadd.f32 %v108, %v518
    %v520 = vpop.f32.mrf.mxu0
    %v521 = vadd.f32 %v112, %v520
    %v522 = vpop.f32.mrf.mxu0
    %v523 = vadd.f32 %v108, %v522
    %v524 = vpop.f32.mrf.mxu0
    %v525 = vadd.f32 %v112, %v524
    %526 = vmatprep.mubr.bf16.mxu0 0
    %527 = vmatmul.mubr.bf16.gmra.mxu0 %v329
    %v528 = vpop.f32.mrf.mxu0
    %v529 = vadd.f32 %v108, %v528
    %v530 = vpop.f32.mrf.mxu0
    %v531 = vadd.f32 %v112, %v530
    %v532 = vpop.f32.mrf.mxu0
    %v533 = vadd.f32 %v108, %v532
    %v534 = vpop.f32.mrf.mxu0
    %v535 = vadd.f32 %v112, %v534
    %536 = vmatprep.mubr.bf16.mxu0 0
    %537 = vmatmul.mubr.bf16.gmra.mxu0 %v332
    %v538 = vpop.f32.mrf.mxu0
    %v539 = vadd.f32 %v108, %v538
    %v540 = vpop.f32.mrf.mxu0
    %v541 = vadd.f32 %v112, %v540
    %v542 = vpop.f32.mrf.mxu0
    %v543 = vadd.f32 %v108, %v542
    %v544 = vpop.f32.mrf.mxu0
    %v545 = vadd.f32 %v112, %v544
    %546 = vmatprep.mubr.bf16.mxu0 0
    %547 = vmatmul.mubr.bf16.gmra.mxu0 %v335
    %v548 = vpop.f32.mrf.mxu0
    %v549 = vadd.f32 %v108, %v548
    %v550 = vpop.f32.mrf.mxu0
    %v551 = vadd.f32 %v112, %v550
    %v552 = vpop.f32.mrf.mxu0
    %v553 = vadd.f32 %v108, %v552
    %v554 = vpop.f32.mrf.mxu0
    %v555 = vadd.f32 %v112, %v554
    %556 = vmatprep.mubr.bf16.mxu0 0
    %557 = vmatmul.mubr.bf16.gmra.mxu0 %v338
    %v558 = vpop.f32.mrf.mxu0
    %v559 = vadd.f32 %v108, %v558
    %v560 = vpop.f32.mrf.mxu0
    %v561 = vadd.f32 %v112, %v560
    %v562 = vpop.f32.mrf.mxu0
    %v563 = vadd.f32 %v108, %v562
    %v564 = vpop.f32.mrf.mxu0
    %v565 = vadd.f32 %v112, %v564
    %566 = vmatprep.mubr.bf16.mxu0 0
    %567 = vmatmul.mubr.bf16.gmra.mxu0 %v341
    %v568 = vpop.f32.mrf.mxu0
    %v569 = vadd.f32 %v108, %v568
    %v570 = vpop.f32.mrf.mxu0
    %v571 = vadd.f32 %v112, %v570
    %v572 = vpop.f32.mrf.mxu0
    %v573 = vadd.f32 %v108, %v572
    %v574 = vpop.f32.mrf.mxu0
    %v575 = vadd.f32 %v112, %v574
    %576 = vmatprep.mubr.bf16.mxu0 0
    %577 = vmatmul.mubr.bf16.gmra.mxu0 %v344
    %v578 = vpop.f32.mrf.mxu0
    %v579 = vadd.f32 %v108, %v578
    %v580 = vpop.f32.mrf.mxu0
    %v581 = vadd.f32 %v112, %v580
    %v582 = vpop.f32.mrf.mxu0
    %v583 = vadd.f32 %v108, %v582
    %v584 = vpop.f32.mrf.mxu0
    %v585 = vadd.f32 %v112, %v584
    %586 = vmatprep.mubr.bf16.mxu0 0
    %587 = vmatmul.mubr.bf16.gmra.mxu0 %v347
    %v588 = vpop.f32.mrf.mxu0
    %v589 = vadd.f32 %v108, %v588
    %v590 = vpop.f32.mrf.mxu0
    %v591 = vadd.f32 %v112, %v590
    %v592 = vpop.f32.mrf.mxu0
    %v593 = vadd.f32 %v108, %v592
    %v594 = vpop.f32.mrf.mxu0
    %v595 = vadd.f32 %v112, %v594
    %596 = vmatprep.mubr.bf16.mxu0 0
    %597 = vmatmul.mubr.bf16.gmra.mxu0 %v350
    %v598 = vpop.f32.mrf.mxu0
    %v599 = vadd.f32 %v108, %v598
    %v600 = vpop.f32.mrf.mxu0
    %v601 = vadd.f32 %v112, %v600
    %v602 = vpop.f32.mrf.mxu0
    %v603 = vadd.f32 %v108, %v602
    %v604 = vpop.f32.mrf.mxu0
    %v605 = vadd.f32 %v112, %v604
    %606 = vmatprep.mubr.bf16.mxu0 0
    %607 = vmatmul.mubr.bf16.gmra.mxu0 %v353
    %v608 = vpop.f32.mrf.mxu0
    %v609 = vadd.f32 %v108, %v608
    %v610 = vpop.f32.mrf.mxu0
    %v611 = vadd.f32 %v112, %v610
    %v612 = vpop.f32.mrf.mxu0
    %v613 = vadd.f32 %v108, %v612
    %v614 = vpop.f32.mrf.mxu0
    %v615 = vadd.f32 %v112, %v614
    %616 = vmatprep.mubr.bf16.mxu0 0
    %617 = vmatmul.mubr.bf16.gmra.mxu0 %v356
    %v618 = vpop.f32.mrf.mxu0
    %v619 = vadd.f32 %v108, %v618
    %v620 = vpop.f32.mrf.mxu0
    %v621 = vadd.f32 %v112, %v620
    %v622 = vpop.f32.mrf.mxu0
    %v623 = vadd.f32 %v108, %v622
    %v624 = vpop.f32.mrf.mxu0
    %v625 = vadd.f32 %v112, %v624
    %626 = vmatprep.mubr.bf16.mxu0 0
    %627 = vmatmul.mubr.bf16.gmra.mxu0 %v359
    %v628 = vpop.f32.mrf.mxu0
    %v629 = vadd.f32 %v108, %v628
    %v630 = vpop.f32.mrf.mxu0
    %v631 = vadd.f32 %v112, %v630
    %v632 = vpop.f32.mrf.mxu0
    %v633 = vadd.f32 %v108, %v632
    %v634 = vpop.f32.mrf.mxu0
    %v635 = vadd.f32 %v112, %v634
    %636 = vmatprep.mubr.bf16.mxu0 0
    %637 = vmatmul.mubr.bf16.gmra.mxu0 %v362
    %v638 = vpop.f32.mrf.mxu0
    %v639 = vadd.f32 %v108, %v638
    %v640 = vpop.f32.mrf.mxu0
    %v641 = vadd.f32 %v112, %v640
    %v642 = vpop.f32.mrf.mxu0
    %v643 = vadd.f32 %v108, %v642
    %v644 = vpop.f32.mrf.mxu0
    %v645 = vadd.f32 %v112, %v644
    %646 = vmatprep.mubr.bf16.mxu0 0
    %647 = vmatmul.mubr.bf16.gmra.mxu0 %v365
    %v648 = vpop.f32.mrf.mxu0
    %v649 = vadd.f32 %v108, %v648
    %v650 = vpop.f32.mrf.mxu0
    %v651 = vadd.f32 %v112, %v650
    %v652 = vpop.f32.mrf.mxu0
    %v653 = vadd.f32 %v108, %v652
    %v654 = vpop.f32.mrf.mxu0
    %v655 = vadd.f32 %v112, %v654
    %656 = vmatprep.mubr.bf16.mxu0 0
    %657 = vmatmul.mubr.bf16.gmra.mxu0 %v368
    %v658 = vpop.f32.mrf.mxu0
    %v659 = vadd.f32 %v108, %v658
    %v660 = vpop.f32.mrf.mxu0
    %v661 = vadd.f32 %v112, %v660
    %v662 = vpop.f32.mrf.mxu0
    %v663 = vadd.f32 %v108, %v662
    %v664 = vpop.f32.mrf.mxu0
    %v665 = vadd.f32 %v112, %v664
    %666 = vmatprep.mubr.bf16.mxu0 0
    %667 = vmatmul.mubr.bf16.gmra.mxu0 %v371
    %v668 = vpop.f32.mrf.mxu0
    %v669 = vadd.f32 %v108, %v668
    %v670 = vpop.f32.mrf.mxu0
    %v671 = vadd.f32 %v112, %v670
    %v672 = vpop.f32.mrf.mxu0
    %v673 = vadd.f32 %v108, %v672
    %v674 = vpop.f32.mrf.mxu0
    %v675 = vadd.f32 %v112, %v674
    %676 = vmatprep.mubr.bf16.mxu0 0
    %677 = vmatmul.mubr.bf16.gmra.mxu0 %v374
    %v678 = vpop.f32.mrf.mxu0
    %v679 = vadd.f32 %v108, %v678
    %v680 = vpop.f32.mrf.mxu0
    %v681 = vadd.f32 %v112, %v680
    %v682 = vpop.f32.mrf.mxu0
    %v683 = vadd.f32 %v108, %v682
    %v684 = vpop.f32.mrf.mxu0
    %v685 = vadd.f32 %v112, %v684
    %686 = vmatprep.mubr.bf16.mxu0 0
    %687 = vmatmul.mubr.bf16.gmra.mxu0 %v377
    %v688 = vpop.f32.mrf.mxu0
    %v689 = vadd.f32 %v108, %v688
    %v690 = vpop.f32.mrf.mxu0
    %v691 = vadd.f32 %v112, %v690
    %v692 = vpop.f32.mrf.mxu0
    %v693 = vadd.f32 %v108, %v692
    %v694 = vpop.f32.mrf.mxu0
    %v695 = vadd.f32 %v112, %v694
    %696 = vmatprep.mubr.bf16.mxu0 0
    %697 = vmatmul.mubr.bf16.gmra.mxu0 %v380
    %v698 = vpop.f32.mrf.mxu0
    %v699 = vadd.f32 %v108, %v698
    %v700 = vpop.f32.mrf.mxu0
    %v701 = vadd.f32 %v112, %v700
    %v702 = vpop.f32.mrf.mxu0
    %v703 = vadd.f32 %v108, %v702
    %v704 = vpop.f32.mrf.mxu0
    %v705 = vadd.f32 %v112, %v704
    %706 = vmatprep.mubr.bf16.mxu0 0
    %707 = vmatmul.mubr.bf16.gmra.mxu0 %v383
    %v708 = vpop.f32.mrf.mxu0
    %v709 = vadd.f32 %v108, %v708
    %v710 = vpop.f32.mrf.mxu0
    %v711 = vadd.f32 %v112, %v710
    %v712 = vpop.f32.mrf.mxu0
    %v713 = vadd.f32 %v108, %v712
    %v714 = vpop.f32.mrf.mxu0
    %v715 = vadd.f32 %v112, %v714
    %716 = vmatprep.mubr.bf16.mxu0 0
    %717 = vmatmul.mubr.bf16.gmra.mxu0 %v386
    %v718 = vpop.f32.mrf.mxu0
    %v719 = vadd.f32 %v108, %v718
    %v720 = vpop.f32.mrf.mxu0
    %v721 = vadd.f32 %v112, %v720
    %v722 = vpop.f32.mrf.mxu0
    %v723 = vadd.f32 %v108, %v722
    %v724 = vpop.f32.mrf.mxu0
    %v725 = vadd.f32 %v112, %v724
    %726 = vmatprep.mubr.bf16.mxu0 0
    %727 = vmatmul.mubr.bf16.gmra.mxu0 %v389
    %v728 = vpop.f32.mrf.mxu0
    %v729 = vadd.f32 %v108, %v728
    %v730 = vpop.f32.mrf.mxu0
    %v731 = vadd.f32 %v112, %v730
    %v732 = vpop.f32.mrf.mxu0
    %v733 = vadd.f32 %v108, %v732
    %v734 = vpop.f32.mrf.mxu0
    %v735 = vadd.f32 %v112, %v734
    %736 = vmatprep.mubr.bf16.mxu0 0
    %737 = vmatmul.mubr.bf16.gmra.mxu0 %v392
    %v738 = vpop.f32.mrf.mxu0
    %v739 = vadd.f32 %v108, %v738
    %v740 = vpop.f32.mrf.mxu0
    %v741 = vadd.f32 %v112, %v740
    %v742 = vpop.f32.mrf.mxu0
    %v743 = vadd.f32 %v108, %v742
    %v744 = vpop.f32.mrf.mxu0
    %v745 = vadd.f32 %v112, %v744
    %746 = vmatprep.mubr.bf16.mxu0 0
    %747 = vmatmul.mubr.bf16.gmra.mxu0 %v395
    %v748 = vpop.f32.mrf.mxu0
    %v749 = vadd.f32 %v108, %v748
    %v750 = vpop.f32.mrf.mxu0
    %v751 = vadd.f32 %v112, %v750
    %v752 = vpop.f32.mrf.mxu0
    %v753 = vadd.f32 %v108, %v752
    %v754 = vpop.f32.mrf.mxu0
    %v755 = vadd.f32 %v112, %v754
    %756 = vdwg.mxu0
    %v757 = vmax.f32 %v439, 0.0
    %v758 = vmax.f32 %v441, 0.0
    %v759 = vmax.f32 %v443, 0.0
    %v760 = vmax.f32 %v445, 0.0
    %v761 = vmax.f32 %v449, 0.0
    %v762 = vmax.f32 %v451, 0.0
    %v763 = vmax.f32 %v453, 0.0
    %v764 = vmax.f32 %v455, 0.0
    %v765 = vmax.f32 %v459, 0.0
    %v766 = vmax.f32 %v461, 0.0
    %v767 = vmax.f32 %v463, 0.0
    %v768 = vmax.f32 %v465, 0.0
    %v769 = vmax.f32 %v469, 0.0
    %v770 = vmax.f32 %v471, 0.0
    %v771 = vmax.f32 %v473, 0.0
    %v772 = vmax.f32 %v475, 0.0
    %v773 = vmax.f32 %v479, 0.0
    %v774 = vmax.f32 %v481, 0.0
    %v775 = vmax.f32 %v483, 0.0
    %v776 = vmax.f32 %v485, 0.0
    %v777 = vmax.f32 %v489, 0.0
    %v778 = vmax.f32 %v491, 0.0
    %v779 = vmax.f32 %v493, 0.0
    %v780 = vmax.f32 %v495, 0.0
    %v781 = vmax.f32 %v499, 0.0
    %v782 = vmax.f32 %v501, 0.0
    %v783 = vmax.f32 %v503, 0.0
    %v784 = vmax.f32 %v505, 0.0
    %v785 = vmax.f32 %v509, 0.0
    %v786 = vmax.f32 %v511, 0.0
    %v787 = vmax.f32 %v513, 0.0
    %v788 = vmax.f32 %v515, 0.0
    %v789 = vmax.f32 %v519, 0.0
    %v790 = vmax.f32 %v521, 0.0
    %v791 = vmax.f32 %v523, 0.0
    %v792 = vmax.f32 %v525, 0.0
    %v793 = vmax.f32 %v529, 0.0
    %v794 = vmax.f32 %v531, 0.0
    %v795 = vmax.f32 %v533, 0.0
    %v796 = vmax.f32 %v535, 0.0
    %v797 = vmax.f32 %v539, 0.0
    %v798 = vmax.f32 %v541, 0.0
    %v799 = vmax.f32 %v543, 0.0
    %v800 = vmax.f32 %v545, 0.0
    %v801 = vmax.f32 %v549, 0.0
    %v802 = vmax.f32 %v551, 0.0
    %v803 = vmax.f32 %v553, 0.0
    %v804 = vmax.f32 %v555, 0.0
    %v805 = vmax.f32 %v559, 0.0
    %v806 = vmax.f32 %v561, 0.0
    %v807 = vmax.f32 %v563, 0.0
    %v808 = vmax.f32 %v565, 0.0
    %v809 = vmax.f32 %v569, 0.0
    %v810 = vmax.f32 %v571, 0.0
    %v811 = vmax.f32 %v573, 0.0
    %v812 = vmax.f32 %v575, 0.0
    %v813 = vmax.f32 %v579, 0.0
    %v814 = vmax.f32 %v581, 0.0
    %v815 = vmax.f32 %v583, 0.0
    %v816 = vmax.f32 %v585, 0.0
    %v817 = vmax.f32 %v589, 0.0
    %v818 = vmax.f32 %v591, 0.0
    %v819 = vmax.f32 %v593, 0.0
    %v820 = vmax.f32 %v595, 0.0
    %v821 = vmax.f32 %v599, 0.0
    %v822 = vmax.f32 %v601, 0.0
    %v823 = vmax.f32 %v603, 0.0
    %v824 = vmax.f32 %v605, 0.0
    %v825 = vmax.f32 %v609, 0.0
    %v826 = vmax.f32 %v611, 0.0
    %v827 = vmax.f32 %v613, 0.0
    %v828 = vmax.f32 %v615, 0.0
    %v829 = vmax.f32 %v619, 0.0
    %v830 = vmax.f32 %v621, 0.0
    %v831 = vmax.f32 %v623, 0.0
    %v832 = vmax.f32 %v625, 0.0
    %v833 = vmax.f32 %v629, 0.0
    %v834 = vmax.f32 %v631, 0.0
    %v835 = vmax.f32 %v633, 0.0
    %v836 = vmax.f32 %v635, 0.0
    %v837 = vmax.f32 %v639, 0.0
    %v838 = vmax.f32 %v641, 0.0
    %v839 = vmax.f32 %v643, 0.0
    %v840 = vmax.f32 %v645, 0.0
    %v841 = vmax.f32 %v649, 0.0
    %v842 = vmax.f32 %v651, 0.0
    %v843 = vmax.f32 %v653, 0.0
    %v844 = vmax.f32 %v655, 0.0
    %v845 = vmax.f32 %v659, 0.0
    %v846 = vmax.f32 %v661, 0.0
    %v847 = vmax.f32 %v663, 0.0
    %v848 = vmax.f32 %v665, 0.0
    %v849 = vmax.f32 %v669, 0.0
    %v850 = vmax.f32 %v671, 0.0
    %v851 = vmax.f32 %v673, 0.0
    %v852 = vmax.f32 %v675, 0.0
    %v853 = vmax.f32 %v679, 0.0
    %v854 = vmax.f32 %v681, 0.0
    %v855 = vmax.f32 %v683, 0.0
    %v856 = vmax.f32 %v685, 0.0
    %v857 = vmax.f32 %v689, 0.0
    %v858 = vmax.f32 %v691, 0.0
    %v859 = vmax.f32 %v693, 0.0
    %v860 = vmax.f32 %v695, 0.0
    %v861 = vmax.f32 %v699, 0.0
    %v862 = vmax.f32 %v701, 0.0
    %v863 = vmax.f32 %v703, 0.0
    %v864 = vmax.f32 %v705, 0.0
    %v865 = vmax.f32 %v709, 0.0
    %v866 = vmax.f32 %v711, 0.0
    %v867 = vmax.f32 %v713, 0.0
    %v868 = vmax.f32 %v715, 0.0
    %v869 = vmax.f32 %v719, 0.0
    %v870 = vmax.f32 %v721, 0.0
    %v871 = vmax.f32 %v723, 0.0
    %v872 = vmax.f32 %v725, 0.0
    %v873 = vmax.f32 %v729, 0.0
    %v874 = vmax.f32 %v731, 0.0
    %v875 = vmax.f32 %v733, 0.0
    %v876 = vmax.f32 %v735, 0.0
    %v877 = vmax.f32 %v739, 0.0
    %v878 = vmax.f32 %v741, 0.0
    %v879 = vmax.f32 %v743, 0.0
    %v880 = vmax.f32 %v745, 0.0
    %v881 = vmax.f32 %v749, 0.0
    %v882 = vmax.f32 %v751, 0.0
    %v883 = vmax.f32 %v753, 0.0
    %v884 = vmax.f32 %v755, 0.0
    %v885 = vadd.f32 %v757, %v759
    %v886 = vadd.f32 %v885, %v761
    %v887 = vadd.f32 %v886, %v763
    %v888 = vadd.f32 %v887, %v765
    %v889 = vadd.f32 %v888, %v767
    %v890 = vadd.f32 %v889, %v769
    %v891 = vadd.f32 %v890, %v771
    %v892 = vadd.f32 %v891, %v773
    %v893 = vadd.f32 %v892, %v775
    %v894 = vadd.f32 %v893, %v777
    %v895 = vadd.f32 %v894, %v779
    %v896 = vadd.f32 %v895, %v781
    %v897 = vadd.f32 %v896, %v783
    %v898 = vadd.f32 %v897, %v785
    %v899 = vadd.f32 %v898, %v787
    %v900 = vadd.f32 %v899, %v789
    %v901 = vadd.f32 %v900, %v791
    %v902 = vadd.f32 %v901, %v793
    %v903 = vadd.f32 %v902, %v795
    %v904 = vadd.f32 %v903, %v797
    %v905 = vadd.f32 %v904, %v799
    %v906 = vadd.f32 %v905, %v801
    %v907 = vadd.f32 %v906, %v803
    %v908 = vadd.f32 %v907, %v805
    %v909 = vadd.f32 %v908, %v807
    %v910 = vadd.f32 %v909, %v809
    %v911 = vadd.f32 %v910, %v811
    %v912 = vadd.f32 %v911, %v813
    %v913 = vadd.f32 %v912, %v815
    %v914 = vadd.f32 %v913, %v817
    %v915 = vadd.f32 %v914, %v819
    %v916 = vrot.slane %v915, 4
    %v917 = vadd.f32 %v915, %v916
    %v918 = vrot.slane %v917, 2
    %v919 = vadd.f32 %v917, %v918
    %v920 = vrot.slane %v919, 1
    %v921 = vadd.f32 %v919, %v920
    %v922 = vadd.f32 %v758, %v760
    %v923 = vadd.f32 %v922, %v762
    %v924 = vadd.f32 %v923, %v764
    %v925 = vadd.f32 %v924, %v766
    %v926 = vadd.f32 %v925, %v768
    %v927 = vadd.f32 %v926, %v770
    %v928 = vadd.f32 %v927, %v772
    %v929 = vadd.f32 %v928, %v774
    %v930 = vadd.f32 %v929, %v776
    %v931 = vadd.f32 %v930, %v778
    %v932 = vadd.f32 %v931, %v780
    %v933 = vadd.f32 %v932, %v782
    %v934 = vadd.f32 %v933, %v784
    %v935 = vadd.f32 %v934, %v786
    %v936 = vadd.f32 %v935, %v788
    %v937 = vadd.f32 %v936, %v790
    %v938 = vadd.f32 %v937, %v792
    %v939 = vadd.f32 %v938, %v794
    %v940 = vadd.f32 %v939, %v796
    %v941 = vadd.f32 %v940, %v798
    %v942 = vadd.f32 %v941, %v800
    %v943 = vadd.f32 %v942, %v802
    %v944 = vadd.f32 %v943, %v804
    %v945 = vadd.f32 %v944, %v806
    %v946 = vadd.f32 %v945, %v808
    %v947 = vadd.f32 %v946, %v810
    %v948 = vadd.f32 %v947, %v812
    %v949 = vadd.f32 %v948, %v814
    %v950 = vadd.f32 %v949, %v816
    %v951 = vadd.f32 %v950, %v818
    %v952 = vadd.f32 %v951, %v820
    %v953 = vrot.slane %v952, 4
    %v954 = vadd.f32 %v952, %v953
    %v955 = vrot.slane %v954, 2
    %v956 = vadd.f32 %v954, %v955
    %v957 = vrot.slane %v956, 1
    %v958 = vadd.f32 %v956, %v957
    %v959 = vadd.f32 %v821, %v823
    %v960 = vadd.f32 %v959, %v825
    %v961 = vadd.f32 %v960, %v827
    %v962 = vadd.f32 %v961, %v829
    %v963 = vadd.f32 %v962, %v831
    %v964 = vadd.f32 %v963, %v833
    %v965 = vadd.f32 %v964, %v835
    %v966 = vadd.f32 %v965, %v837
    %v967 = vadd.f32 %v966, %v839
    %v968 = vadd.f32 %v967, %v841
    %v969 = vadd.f32 %v968, %v843
    %v970 = vadd.f32 %v969, %v845
    %v971 = vadd.f32 %v970, %v847
    %v972 = vadd.f32 %v971, %v849
    %v973 = vadd.f32 %v972, %v851
    %v974 = vadd.f32 %v973, %v853
    %v975 = vadd.f32 %v974, %v855
    %v976 = vadd.f32 %v975, %v857
    %v977 = vadd.f32 %v976, %v859
    %v978 = vadd.f32 %v977, %v861
    %v979 = vadd.f32 %v978, %v863
    %v980 = vadd.f32 %v979, %v865
    %v981 = vadd.f32 %v980, %v867
    %v982 = vadd.f32 %v981, %v869
    %v983 = vadd.f32 %v982, %v871
    %v984 = vadd.f32 %v983, %v873
    %v985 = vadd.f32 %v984, %v875
    %v986 = vadd.f32 %v985, %v877
    %v987 = vadd.f32 %v986, %v879
    %v988 = vadd.f32 %v987, %v881
    %v989 = vadd.f32 %v988, %v883
    %v990 = vrot.slane %v989, 4
    %v991 = vadd.f32 %v989, %v990
    %v992 = vrot.slane %v991, 2
    %v993 = vadd.f32 %v991, %v992
    %v994 = vrot.slane %v993, 1
    %v995 = vadd.f32 %v993, %v994
    %v996 = vadd.f32 %v822, %v824
    %v997 = vadd.f32 %v996, %v826
    %v998 = vadd.f32 %v997, %v828
    %v999 = vadd.f32 %v998, %v830
    %v1000 = vadd.f32 %v999, %v832
    %v1001 = vadd.f32 %v1000, %v834
    %v1002 = vadd.f32 %v1001, %v836
    %v1003 = vadd.f32 %v1002, %v838
    %v1004 = vadd.f32 %v1003, %v840
    %v1005 = vadd.f32 %v1004, %v842
    %v1006 = vadd.f32 %v1005, %v844
    %v1007 = vadd.f32 %v1006, %v846
    %v1008 = vadd.f32 %v1007, %v848
    %v1009 = vadd.f32 %v1008, %v850
    %v1010 = vadd.f32 %v1009, %v852
    %v1011 = vadd.f32 %v1010, %v854
    %v1012 = vadd.f32 %v1011, %v856
    %v1013 = vadd.f32 %v1012, %v858
    %v1014 = vadd.f32 %v1013, %v860
    %v1015 = vadd.f32 %v1014, %v862
    %v1016 = vadd.f32 %v1015, %v864
    %v1017 = vadd.f32 %v1016, %v866
    %v1018 = vadd.f32 %v1017, %v868
    %v1019 = vadd.f32 %v1018, %v870
    %v1020 = vadd.f32 %v1019, %v872
    %v1021 = vadd.f32 %v1020, %v874
    %v1022 = vadd.f32 %v1021, %v876
    %v1023 = vadd.f32 %v1022, %v878
    %v1024 = vadd.f32 %v1023, %v880
    %v1025 = vadd.f32 %v1024, %v882
    %v1026 = vadd.f32 %v1025, %v884
    %v1027 = vrot.slane %v1026, 4
    %v1028 = vadd.f32 %v1026, %v1027
    %v1029 = vrot.slane %v1028, 2
    %v1030 = vadd.f32 %v1028, %v1029
    %v1031 = vrot.slane %v1030, 1
    %v1032 = vadd.f32 %v1030, %v1031
    %v1033 = vmul.f32 %v921, 0.00390625
    %v1034 = vmul.f32 %v958, 0.00390625
    %v1035 = vmul.f32 %v995, 0.00390625
    %v1036 = vmul.f32 %v1032, 0.00390625
    %v1041 = vcombine.low %v1033, %v1034
    %v1043 = vunpack.c.l.s4 1983009808
    %v1044 = vunpack.c.0.s8 %v1043
    %v1045 = vlaneseq
    %v1046 = vshrl.u32 %v1045, 7
    %v1047 = vsub.s32 %v1044, %v1046
    %v1048 = vrot.slane %v1041, %v1047
    %v1049 = vcombine.low %v1035, %v1036
    %v1051 = vunpack.c.l.s4 1983009808
    %v1052 = vunpack.c.0.s8 %v1051
    %v1053 = vlaneseq
    %v1054 = vshrl.u32 %v1053, 7
    %v1055 = vsub.s32 %v1052, %v1054
    %v1056 = vrot.slane %v1049, %v1055
    %vm1057 = vcmask 1044484
    %v1058 = vsel %vm1057, %v1048, %v1048
    %vm1059 = vcmask 1046534
    %v1060 = vsel %vm1059, %v1048, %v1058
    %v1061 = vrot.slane %v1056, 7
    %vm1062 = vcmask 1041409
    %v1063 = vsel %vm1062, %v1061, %v1060
    %vm1064 = vcmask 1043459
    %v1065 = vsel %vm1064, %v1061, %v1063
    %vm1066 = vcmask 1045509
    %v1067 = vsel %vm1066, %v1061, %v1065
    %vm1068 = vcmask 1047559
    %v1069 = vsel %vm1068, %v1061, %v1067
    %1071 = vst [vmem:[#allocation2] sm:$0xf] %v1069
    %v1072 = vpack.c.bf16 %v1033, %v1033
    %v1073 = vpack.c.bf16 %v1034, %v1034
    %v1074 = vpack.c.bf16 %v1035, %v1035
    %v1075 = vpack.c.bf16 %v1036, %v1036
    %v1076 = vld [vmem:[%s3] sm:$0xff]
    %v1077 = vld [vmem:[%s3 + $0x8] sm:$0xff]
    %v1078 = vld [vmem:[%s3 + $0x10] sm:$0xff]
    %v1079 = vld [vmem:[%s3 + $0x18] sm:$0xff]
    %v1080 = vld [vmem:[%s3 + $0x20] sm:$0xff]
    %v1081 = vld [vmem:[%s3 + $0x28] sm:$0xff]
    %v1082 = vld [vmem:[%s3 + $0x30] sm:$0xff]
    %v1083 = vld [vmem:[%s3 + $0x38] sm:$0xff]
    %v1084 = vld [vmem:[%s3 + $0x40] sm:$0xff]
    %v1085 = vld [vmem:[%s3 + $0x48] sm:$0xff]
    %v1086 = vld [vmem:[%s3 + $0x50] sm:$0xff]
    %v1087 = vld [vmem:[%s3 + $0x58] sm:$0xff]
    %v1088 = vld [vmem:[%s3 + $0x60] sm:$0xff]
    %v1089 = vld [vmem:[%s3 + $0x68] sm:$0xff]
    %v1090 = vld [vmem:[%s3 + $0x70] sm:$0xff]
    %v1091 = vld [vmem:[%s3 + $0x78] sm:$0xff]
    %v1092 = vld [vmem:[%s3 + $0x80] sm:$0xff]
    %v1093 = vld [vmem:[%s3 + $0x88] sm:$0xff]
    %v1094 = vld [vmem:[%s3 + $0x90] sm:$0xff]
    %v1095 = vld [vmem:[%s3 + $0x98] sm:$0xff]
    %v1096 = vld [vmem:[%s3 + $0xa0] sm:$0xff]
    %v1097 = vld [vmem:[%s3 + $0xa8] sm:$0xff]
    %v1098 = vld [vmem:[%s3 + $0xb0] sm:$0xff]
    %v1099 = vld [vmem:[%s3 + $0xb8] sm:$0xff]
    %v1100 = vld [vmem:[%s3 + $0xc0] sm:$0xff]
    %v1101 = vld [vmem:[%s3 + $0xc8] sm:$0xff]
    %v1102 = vld [vmem:[%s3 + $0xd0] sm:$0xff]
    %v1103 = vld [vmem:[%s3 + $0xd8] sm:$0xff]
    %v1104 = vld [vmem:[%s3 + $0xe0] sm:$0xff]
    %v1105 = vld [vmem:[%s3 + $0xe8] sm:$0xff]
    %v1106 = vld [vmem:[%s3 + $0xf0] sm:$0xff]
    %v1107 = vld [vmem:[%s3 + $0xf8] sm:$0xff]
    %v1108 = vld [vmem:[%s3 + $0x100] sm:$0xff]
    %v1109 = vld [vmem:[%s3 + $0x108] sm:$0xff]
    %v1110 = vld [vmem:[%s3 + $0x110] sm:$0xff]
    %v1111 = vld [vmem:[%s3 + $0x118] sm:$0xff]
    %v1112 = vld [vmem:[%s3 + $0x120] sm:$0xff]
    %v1113 = vld [vmem:[%s3 + $0x128] sm:$0xff]
    %v1114 = vld [vmem:[%s3 + $0x130] sm:$0xff]
    %v1115 = vld [vmem:[%s3 + $0x138] sm:$0xff]
    %v1116 = vld [vmem:[%s3 + $0x140] sm:$0xff]
    %v1117 = vld [vmem:[%s3 + $0x148] sm:$0xff]
    %v1118 = vld [vmem:[%s3 + $0x150] sm:$0xff]
    %v1119 = vld [vmem:[%s3 + $0x158] sm:$0xff]
    %v1120 = vld [vmem:[%s3 + $0x160] sm:$0xff]
    %v1121 = vld [vmem:[%s3 + $0x168] sm:$0xff]
    %v1122 = vld [vmem:[%s3 + $0x170] sm:$0xff]
    %v1123 = vld [vmem:[%s3 + $0x178] sm:$0xff]
    %v1124 = vld [vmem:[%s3 + $0x180] sm:$0xff]
    %v1125 = vld [vmem:[%s3 + $0x188] sm:$0xff]
    %v1126 = vld [vmem:[%s3 + $0x190] sm:$0xff]
    %v1127 = vld [vmem:[%s3 + $0x198] sm:$0xff]
    %v1128 = vld [vmem:[%s3 + $0x1a0] sm:$0xff]
    %v1129 = vld [vmem:[%s3 + $0x1a8] sm:$0xff]
    %v1130 = vld [vmem:[%s3 + $0x1b0] sm:$0xff]
    %v1131 = vld [vmem:[%s3 + $0x1b8] sm:$0xff]
    %v1132 = vld [vmem:[%s3 + $0x1c0] sm:$0xff]
    %v1133 = vld [vmem:[%s3 + $0x1c8] sm:$0xff]
    %v1134 = vld [vmem:[%s3 + $0x1d0] sm:$0xff]
    %v1135 = vld [vmem:[%s3 + $0x1d8] sm:$0xff]
    %v1136 = vld [vmem:[%s3 + $0x1e0] sm:$0xff]
    %v1137 = vld [vmem:[%s3 + $0x1e8] sm:$0xff]
    %v1138 = vld [vmem:[%s3 + $0x1f0] sm:$0xff]
    %v1139 = vld [vmem:[%s3 + $0x1f8] sm:$0xff]
    %v1144 = vunpack.c.l.b16 %v1072
    %v1145 = vunpack.c.l.b16 %v1073
    %v1146 = vunpack.c.l.b16 %v1074
    %v1147 = vunpack.c.l.b16 %v1075
    %v1148 = vsel %vm1062, %v1146, %v1144
    %v1149 = vsel %vm1062, %v1147, %v1145
    %v1150 = vpack.c.b16 %v1148, %v1148
    %v1151 = vpack.c.b16 %v1149, %v1149
    %v1218 = vunpack.c.l.b16 %v1076
    %v1219 = vunpack.c.h.b16 %v1076
    %v1220 = vunpack.c.l.b16 %v1077
    %v1221 = vunpack.c.h.b16 %v1077
    %v1222 = vunpack.c.l.b16 %v1078
    %v1223 = vunpack.c.h.b16 %v1078
    %v1224 = vunpack.c.l.b16 %v1079
    %v1225 = vunpack.c.h.b16 %v1079
    %v1226 = vunpack.c.l.b16 %v1080
    %v1227 = vunpack.c.h.b16 %v1080
    %v1228 = vunpack.c.l.b16 %v1081
    %v1229 = vunpack.c.h.b16 %v1081
    %v1230 = vunpack.c.l.b16 %v1082
    %v1231 = vunpack.c.h.b16 %v1082
    %v1232 = vunpack.c.l.b16 %v1083
    %v1233 = vunpack.c.h.b16 %v1083
    %v1234 = vunpack.c.l.b16 %v1084
    %v1235 = vunpack.c.h.b16 %v1084
    %v1236 = vunpack.c.l.b16 %v1085
    %v1237 = vunpack.c.h.b16 %v1085
    %v1238 = vunpack.c.l.b16 %v1086
    %v1239 = vunpack.c.h.b16 %v1086
    %v1240 = vunpack.c.l.b16 %v1087
    %v1241 = vunpack.c.h.b16 %v1087
    %v1242 = vunpack.c.l.b16 %v1088
    %v1243 = vunpack.c.h.b16 %v1088
    %v1244 = vunpack.c.l.b16 %v1089
    %v1245 = vunpack.c.h.b16 %v1089
    %v1246 = vunpack.c.l.b16 %v1090
    %v1247 = vunpack.c.h.b16 %v1090
    %v1248 = vunpack.c.l.b16 %v1091
    %v1249 = vunpack.c.h.b16 %v1091
    %v1250 = vunpack.c.l.b16 %v1092
    %v1251 = vunpack.c.h.b16 %v1092
    %v1252 = vunpack.c.l.b16 %v1093
    %v1253 = vunpack.c.h.b16 %v1093
    %v1254 = vunpack.c.l.b16 %v1094
    %v1255 = vunpack.c.h.b16 %v1094
    %v1256 = vunpack.c.l.b16 %v1095
    %v1257 = vunpack.c.h.b16 %v1095
    %v1258 = vunpack.c.l.b16 %v1096
    %v1259 = vunpack.c.h.b16 %v1096
    %v1260 = vunpack.c.l.b16 %v1097
    %v1261 = vunpack.c.h.b16 %v1097
    %v1262 = vunpack.c.l.b16 %v1098
    %v1263 = vunpack.c.h.b16 %v1098
    %v1264 = vunpack.c.l.b16 %v1099
    %v1265 = vunpack.c.h.b16 %v1099
    %v1266 = vunpack.c.l.b16 %v1100
    %v1267 = vunpack.c.h.b16 %v1100
    %v1268 = vunpack.c.l.b16 %v1101
    %v1269 = vunpack.c.h.b16 %v1101
    %v1270 = vunpack.c.l.b16 %v1102
    %v1271 = vunpack.c.h.b16 %v1102
    %v1272 = vunpack.c.l.b16 %v1103
    %v1273 = vunpack.c.h.b16 %v1103
    %v1274 = vunpack.c.l.b16 %v1104
    %v1275 = vunpack.c.h.b16 %v1104
    %v1276 = vunpack.c.l.b16 %v1105
    %v1277 = vunpack.c.h.b16 %v1105
    %v1278 = vunpack.c.l.b16 %v1106
    %v1279 = vunpack.c.h.b16 %v1106
    %v1280 = vunpack.c.l.b16 %v1107
    %v1281 = vunpack.c.h.b16 %v1107
    %v1282 = vunpack.c.l.b16 %v1108
    %v1283 = vunpack.c.h.b16 %v1108
    %v1284 = vunpack.c.l.b16 %v1109
    %v1285 = vunpack.c.h.b16 %v1109
    %v1286 = vunpack.c.l.b16 %v1110
    %v1287 = vunpack.c.h.b16 %v1110
    %v1288 = vunpack.c.l.b16 %v1111
    %v1289 = vunpack.c.h.b16 %v1111
    %v1290 = vunpack.c.l.b16 %v1112
    %v1291 = vunpack.c.h.b16 %v1112
    %v1292 = vunpack.c.l.b16 %v1113
    %v1293 = vunpack.c.h.b16 %v1113
    %v1294 = vunpack.c.l.b16 %v1114
    %v1295 = vunpack.c.h.b16 %v1114
    %v1296 = vunpack.c.l.b16 %v1115
    %v1297 = vunpack.c.h.b16 %v1115
    %v1298 = vunpack.c.l.b16 %v1116
    %v1299 = vunpack.c.h.b16 %v1116
    %v1300 = vunpack.c.l.b16 %v1117
    %v1301 = vunpack.c.h.b16 %v1117
    %v1302 = vunpack.c.l.b16 %v1118
    %v1303 = vunpack.c.h.b16 %v1118
    %v1304 = vunpack.c.l.b16 %v1119
    %v1305 = vunpack.c.h.b16 %v1119
    %v1306 = vunpack.c.l.b16 %v1120
    %v1307 = vunpack.c.h.b16 %v1120
    %v1308 = vunpack.c.l.b16 %v1121
    %v1309 = vunpack.c.h.b16 %v1121
    %v1310 = vunpack.c.l.b16 %v1122
    %v1311 = vunpack.c.h.b16 %v1122
    %v1312 = vunpack.c.l.b16 %v1123
    %v1313 = vunpack.c.h.b16 %v1123
    %v1314 = vunpack.c.l.b16 %v1124
    %v1315 = vunpack.c.h.b16 %v1124
    %v1316 = vunpack.c.l.b16 %v1125
    %v1317 = vunpack.c.h.b16 %v1125
    %v1318 = vunpack.c.l.b16 %v1126
    %v1319 = vunpack.c.h.b16 %v1126
    %v1320 = vunpack.c.l.b16 %v1127
    %v1321 = vunpack.c.h.b16 %v1127
    %v1322 = vunpack.c.l.b16 %v1128
    %v1323 = vunpack.c.h.b16 %v1128
    %v1324 = vunpack.c.l.b16 %v1129
    %v1325 = vunpack.c.h.b16 %v1129
    %v1326 = vunpack.c.l.b16 %v1130
    %v1327 = vunpack.c.h.b16 %v1130
    %v1328 = vunpack.c.l.b16 %v1131
    %v1329 = vunpack.c.h.b16 %v1131
    %v1330 = vunpack.c.l.b16 %v1132
    %v1331 = vunpack.c.h.b16 %v1132
    %v1332 = vunpack.c.l.b16 %v1133
    %v1333 = vunpack.c.h.b16 %v1133
    %v1334 = vunpack.c.l.b16 %v1134
    %v1335 = vunpack.c.h.b16 %v1134
    %v1336 = vunpack.c.l.b16 %v1135
    %v1337 = vunpack.c.h.b16 %v1135
    %v1338 = vunpack.c.l.b16 %v1136
    %v1339 = vunpack.c.h.b16 %v1136
    %v1340 = vunpack.c.l.b16 %v1137
    %v1341 = vunpack.c.h.b16 %v1137
    %v1342 = vunpack.c.l.b16 %v1138
    %v1343 = vunpack.c.h.b16 %v1138
    %v1344 = vunpack.c.l.b16 %v1139
    %v1345 = vunpack.c.h.b16 %v1139
    %v1346 = vpack.c.b16 %v1222, %v1218
    %v1347 = vpack.c.b16 %v1223, %v1219
    %v1348 = vpack.c.b16 %v1224, %v1220
    %v1349 = vpack.c.b16 %v1225, %v1221
    %v1350 = vpack.c.b16 %v1230, %v1226
    %v1351 = vpack.c.b16 %v1231, %v1227
    %v1352 = vpack.c.b16 %v1232, %v1228
    %v1353 = vpack.c.b16 %v1233, %v1229
    %v1354 = vpack.c.b16 %v1238, %v1234
    %v1355 = vpack.c.b16 %v1239, %v1235
    %v1356 = vpack.c.b16 %v1240, %v1236
    %v1357 = vpack.c.b16 %v1241, %v1237
    %v1358 = vpack.c.b16 %v1246, %v1242
    %v1359 = vpack.c.b16 %v1247, %v1243
    %v1360 = vpack.c.b16 %v1248, %v1244
    %v1361 = vpack.c.b16 %v1249, %v1245
    %v1362 = vpack.c.b16 %v1254, %v1250
    %v1363 = vpack.c.b16 %v1255, %v1251
    %v1364 = vpack.c.b16 %v1256, %v1252
    %v1365 = vpack.c.b16 %v1257, %v1253
    %v1366 = vpack.c.b16 %v1262, %v1258
    %v1367 = vpack.c.b16 %v1263, %v1259
    %v1368 = vpack.c.b16 %v1264, %v1260
    %v1369 = vpack.c.b16 %v1265, %v1261
    %v1370 = vpack.c.b16 %v1270, %v1266
    %v1371 = vpack.c.b16 %v1271, %v1267
    %v1372 = vpack.c.b16 %v1272, %v1268
    %v1373 = vpack.c.b16 %v1273, %v1269
    %v1374 = vpack.c.b16 %v1278, %v1274
    %v1375 = vpack.c.b16 %v1279, %v1275
    %v1376 = vpack.c.b16 %v1280, %v1276
    %v1377 = vpack.c.b16 %v1281, %v1277
    %v1378 = vpack.c.b16 %v1286, %v1282
    %v1379 = vpack.c.b16 %v1287, %v1283
    %v1380 = vpack.c.b16 %v1288, %v1284
    %v1381 = vpack.c.b16 %v1289, %v1285
    %v1382 = vpack.c.b16 %v1294, %v1290
    %v1383 = vpack.c.b16 %v1295, %v1291
    %v1384 = vpack.c.b16 %v1296, %v1292
    %v1385 = vpack.c.b16 %v1297, %v1293
    %v1386 = vpack.c.b16 %v1302, %v1298
    %v1387 = vpack.c.b16 %v1303, %v1299
    %v1388 = vpack.c.b16 %v1304, %v1300
    %v1389 = vpack.c.b16 %v1305, %v1301
    %v1390 = vpack.c.b16 %v1310, %v1306
    %v1391 = vpack.c.b16 %v1311, %v1307
    %v1392 = vpack.c.b16 %v1312, %v1308
    %v1393 = vpack.c.b16 %v1313, %v1309
    %v1394 = vpack.c.b16 %v1318, %v1314
    %v1395 = vpack.c.b16 %v1319, %v1315
    %v1396 = vpack.c.b16 %v1320, %v1316
    %v1397 = vpack.c.b16 %v1321, %v1317
    %v1398 = vpack.c.b16 %v1326, %v1322
    %v1399 = vpack.c.b16 %v1327, %v1323
    %v1400 = vpack.c.b16 %v1328, %v1324
    %v1401 = vpack.c.b16 %v1329, %v1325
    %v1402 = vpack.c.b16 %v1334, %v1330
    %v1403 = vpack.c.b16 %v1335, %v1331
    %v1404 = vpack.c.b16 %v1336, %v1332
    %v1405 = vpack.c.b16 %v1337, %v1333
    %v1406 = vpack.c.b16 %v1342, %v1338
    %v1407 = vpack.c.b16 %v1343, %v1339
    %v1408 = vpack.c.b16 %v1344, %v1340
    %v1409 = vpack.c.b16 %v1345, %v1341
    %1474 = vmatprep.subr.bf16.mxu0 %v1375
    %1475 = vmatpush1.bf16.msra.mxu0 %v1374
    %1476 = vmatprep.subr.bf16.mxu0 %v1371
    %1477 = vmatpush1.bf16.msra.mxu0 %v1370
    %1478 = vmatprep.subr.bf16.mxu0 %v1367
    %1479 = vmatpush1.bf16.msra.mxu0 %v1366
    %1480 = vmatprep.subr.bf16.mxu0 %v1363
    %1481 = vmatpush1.bf16.msra.mxu0 %v1362
    %1482 = vmatprep.subr.bf16.mxu0 %v1359
    %1483 = vmatpush1.bf16.msra.mxu0 %v1358
    %1484 = vmatprep.subr.bf16.mxu0 %v1355
    %1485 = vmatpush1.bf16.msra.mxu0 %v1354
    %1486 = vmatprep.subr.bf16.mxu0 %v1351
    %1487 = vmatpush1.bf16.msra.mxu0 %v1350
    %1488 = vmatprep.subr.bf16.mxu0 %v1347
    %1489 = vmatpush1.bf16.msra.mxu0 %v1346
    %1490 = vmatprep.subr.bf16.mxu0 %v1407
    %1491 = vmatpush2.bf16.msra.mxu0 %v1406
    %1492 = vmatprep.subr.bf16.mxu0 %v1403
    %1493 = vmatpush2.bf16.msra.mxu0 %v1402
    %1494 = vmatprep.subr.bf16.mxu0 %v1399
    %1495 = vmatpush2.bf16.msra.mxu0 %v1398
    %1496 = vmatprep.subr.bf16.mxu0 %v1395
    %1497 = vmatpush2.bf16.msra.mxu0 %v1394
    %1498 = vmatprep.subr.bf16.mxu0 %v1391
    %1499 = vmatpush2.bf16.msra.mxu0 %v1390
    %1500 = vmatprep.subr.bf16.mxu0 %v1387
    %1501 = vmatpush2.bf16.msra.mxu0 %v1386
    %1502 = vmatprep.subr.bf16.mxu0 %v1383
    %1503 = vmatpush2.bf16.msra.mxu0 %v1382
    %1504 = vmatprep.subr.bf16.mxu0 %v1379
    %1505 = vmatpush2.bf16.msra.mxu0 %v1378
    %1506 = vmatprep.mubr.bf16.mxu0 %v1151
    %1507 = vmatmul.mubr.bf16.gmra.mxu0 %v1150
    %v1508 = vpop.f32.mrf.mxu0
    %v1509 = vadd.f32 0.0, %v1508
    %v1510 = vpop.f32.mrf.mxu0
    %v1511 = vadd.f32 0.0, %v1510
    %v1512 = vpop.f32.mrf.mxu0
    %v1513 = vpop.f32.mrf.mxu0
    %1514 = vdwg.mxu0
    %1515 = vmatprep.subr.bf16.mxu0 %v1377
    %1516 = vmatpush1.bf16.msra.mxu0 %v1376
    %1517 = vmatprep.subr.bf16.mxu0 %v1373
    %1518 = vmatpush1.bf16.msra.mxu0 %v1372
    %1519 = vmatprep.subr.bf16.mxu0 %v1369
    %1520 = vmatpush1.bf16.msra.mxu0 %v1368
    %1521 = vmatprep.subr.bf16.mxu0 %v1365
    %1522 = vmatpush1.bf16.msra.mxu0 %v1364
    %1523 = vmatprep.subr.bf16.mxu0 %v1361
    %1524 = vmatpush1.bf16.msra.mxu0 %v1360
    %1525 = vmatprep.subr.bf16.mxu0 %v1357
    %1526 = vmatpush1.bf16.msra.mxu0 %v1356
    %1527 = vmatprep.subr.bf16.mxu0 %v1353
    %1528 = vmatpush1.bf16.msra.mxu0 %v1352
    %1529 = vmatprep.subr.bf16.mxu0 %v1349
    %1530 = vmatpush1.bf16.msra.mxu0 %v1348
    %1531 = vmatprep.subr.bf16.mxu0 %v1409
    %1532 = vmatpush2.bf16.msra.mxu0 %v1408
    %1533 = vmatprep.subr.bf16.mxu0 %v1405
    %1534 = vmatpush2.bf16.msra.mxu0 %v1404
    %1535 = vmatprep.subr.bf16.mxu0 %v1401
    %1536 = vmatpush2.bf16.msra.mxu0 %v1400
    %1537 = vmatprep.subr.bf16.mxu0 %v1397
    %1538 = vmatpush2.bf16.msra.mxu0 %v1396
    %1539 = vmatprep.subr.bf16.mxu0 %v1393
    %1540 = vmatpush2.bf16.msra.mxu0 %v1392
    %1541 = vmatprep.subr.bf16.mxu0 %v1389
    %1542 = vmatpush2.bf16.msra.mxu0 %v1388
    %1543 = vmatprep.subr.bf16.mxu0 %v1385
    %1544 = vmatpush2.bf16.msra.mxu0 %v1384
    %1545 = vmatprep.subr.bf16.mxu0 %v1381
    %1546 = vmatpush2.bf16.msra.mxu0 %v1380
    %1547 = vmatprep.mubr.bf16.mxu0 %v1151
    %1548 = vmatmul.mubr.bf16.gmra.mxu0 %v1150
    %v1549 = vpop.f32.mrf.mxu0
    %v1550 = vadd.f32 0.0, %v1549
    %v1551 = vpop.f32.mrf.mxu0
    %v1552 = vadd.f32 0.0, %v1551
    %v1553 = vpop.f32.mrf.mxu0
    %v1554 = vpop.f32.mrf.mxu0
    %1555 = vdwg.mxu0
    %v1556 = vsel %vm397, %v1509, 0.0
    %v1557 = vrot.slane %v1556, 4
    %v1558 = vadd.f32 %v1556, %v1557
    %v1559 = vrot.slane %v1558, 2
    %v1560 = vadd.f32 %v1558, %v1559
    %v1561 = vrot.slane %v1560, 1
    %v1562 = vadd.f32 %v1560, %v1561
    %v1563 = vsel %vm397, %v1511, 0.0
    %v1564 = vrot.slane %v1563, 4
    %v1565 = vadd.f32 %v1563, %v1564
    %v1566 = vrot.slane %v1565, 2
    %v1567 = vadd.f32 %v1565, %v1566
    %v1568 = vrot.slane %v1567, 1
    %v1569 = vadd.f32 %v1567, %v1568
    %v1570 = vsel %vm397, %v1550, 0.0
    %v1571 = vrot.slane %v1570, 4
    %v1572 = vadd.f32 %v1570, %v1571
    %v1573 = vrot.slane %v1572, 2
    %v1574 = vadd.f32 %v1572, %v1573
    %v1575 = vrot.slane %v1574, 1
    %v1576 = vadd.f32 %v1574, %v1575
    %v1577 = vsel %vm397, %v1552, 0.0
    %v1578 = vrot.slane %v1577, 4
    %v1579 = vadd.f32 %v1577, %v1578
    %v1580 = vrot.slane %v1579, 2
    %v1581 = vadd.f32 %v1579, %v1580
    %v1582 = vrot.slane %v1581, 1
    %v1583 = vadd.f32 %v1581, %v1582
    %v1584 = vrcp.pop 2.0
    %v1585 = vmul.f32 %v1562, %v1584
    %v1586 = vmul.f32 %v1569, %v1584
    %v1587 = vmul.f32 %v1576, %v1584
    %v1588 = vmul.f32 %v1583, %v1584
    %v1589 = vsub.f32 %v1509, %v1585
    %v1590 = vsub.f32 %v1511, %v1586
    %v1591 = vsub.f32 %v1550, %v1587
    %v1592 = vsub.f32 %v1552, %v1588
    %v1593 = vmul.f32 %v1589, %v1589
    %v1594 = vmul.f32 %v1590, %v1590
    %v1595 = vmul.f32 %v1591, %v1591
    %v1596 = vmul.f32 %v1592, %v1592
    %v1597 = vsel %vm397, %v1593, 0.0
    %v1598 = vrot.slane %v1597, 4
    %v1599 = vadd.f32 %v1597, %v1598
    %v1600 = vrot.slane %v1599, 2
    %v1601 = vadd.f32 %v1599, %v1600
    %v1602 = vrot.slane %v1601, 1
    %v1603 = vadd.f32 %v1601, %v1602
    %v1604 = vsel %vm397, %v1594, 0.0
    %v1605 = vrot.slane %v1604, 4
    %v1606 = vadd.f32 %v1604, %v1605
    %v1607 = vrot.slane %v1606, 2
    %v1608 = vadd.f32 %v1606, %v1607
    %v1609 = vrot.slane %v1608, 1
    %v1610 = vadd.f32 %v1608, %v1609
    %v1611 = vsel %vm397, %v1595, 0.0
    %v1612 = vrot.slane %v1611, 4
    %v1613 = vadd.f32 %v1611, %v1612
    %v1614 = vrot.slane %v1613, 2
    %v1615 = vadd.f32 %v1613, %v1614
    %v1616 = vrot.slane %v1615, 1
    %v1617 = vadd.f32 %v1615, %v1616
    %v1618 = vsel %vm397, %v1596, 0.0
    %v1619 = vrot.slane %v1618, 4
    %v1620 = vadd.f32 %v1618, %v1619
    %v1621 = vrot.slane %v1620, 2
    %v1622 = vadd.f32 %v1620, %v1621
    %v1623 = vrot.slane %v1622, 1
    %v1624 = vadd.f32 %v1622, %v1623
    %v1625 = vmul.f32 %v1603, %v1584
    %v1626 = vmul.f32 %v1610, %v1584
    %v1627 = vmul.f32 %v1617, %v1584
    %v1628 = vmul.f32 %v1624, %v1584
    %v1629 = vadd.f32 %v1625, 1e-05
    %v1630 = vadd.f32 %v1626, 1e-05
    %v1631 = vadd.f32 %v1627, 1e-05
    %v1632 = vadd.f32 %v1628, 1e-05
    %v1633 = vrsqrt.pop %v1629
    %v1634 = vrsqrt.pop %v1630
    %v1635 = vrsqrt.pop %v1631
    %v1636 = vrsqrt.pop %v1632
    %v1637 = vmul.f32 %v1589, %v1633
    %v1638 = vmul.f32 %v1590, %v1634
    %v1639 = vmul.f32 %v1591, %v1635
    %v1640 = vmul.f32 %v1592, %v1636
    %v1641 = vld [vmem:[%s4] sm:$0xf]
    %v1643 = vlaneseq
    %v1644 = vshrl.u32 %v1643, 7
    %v1645 = vsub.s32 0, %v1644
    %v1646 = vrot.slane %v1641, %v1645
    %v1647 = vlaneseq
    %v1648 = vshrl.u32 %v1647, 7
    %v1649 = vsub.s32 1, %v1648
    %v1650 = vrot.slane %v1641, %v1649
    %v1651 = vlaneseq
    %v1652 = vshrl.u32 %v1651, 7
    %v1653 = vsub.s32 2, %v1652
    %v1654 = vrot.slane %v1641, %v1653
    %v1655 = vlaneseq
    %v1656 = vshrl.u32 %v1655, 7
    %v1657 = vsub.s32 3, %v1656
    %v1658 = vrot.slane %v1641, %v1657
    %v1663 = vmul.f32 %v1637, %v1646
    %v1664 = vmul.f32 %v1638, %v1650
    %v1665 = vmul.f32 %v1639, %v1654
    %v1666 = vmul.f32 %v1640, %v1658
    %v1667 = vld [vmem:[%s5] sm:$0xf]
    %v1669 = vlaneseq
    %v1670 = vshrl.u32 %v1669, 7
    %v1671 = vsub.s32 0, %v1670
    %v1672 = vrot.slane %v1667, %v1671
    %v1673 = vlaneseq
    %v1674 = vshrl.u32 %v1673, 7
    %v1675 = vsub.s32 1, %v1674
    %v1676 = vrot.slane %v1667, %v1675
    %v1677 = vlaneseq
    %v1678 = vshrl.u32 %v1677, 7
    %v1679 = vsub.s32 2, %v1678
    %v1680 = vrot.slane %v1667, %v1679
    %v1681 = vlaneseq
    %v1682 = vshrl.u32 %v1681, 7
    %v1683 = vsub.s32 3, %v1682
    %v1684 = vrot.slane %v1667, %v1683
    %v1689 = vadd.f32 %v1663, %v1672
    %v1690 = vadd.f32 %v1664, %v1676
    %v1691 = vadd.f32 %v1665, %v1680
    %v1692 = vadd.f32 %v1666, %v1684
    %v1693 = vmax.f32 %v1689, 0.0
    %v1694 = vmax.f32 %v1690, 0.0
    %v1695 = vmax.f32 %v1691, 0.0
    %v1696 = vmax.f32 %v1692, 0.0
    %v1697 = vpack.c.bf16 %v1693, %v1693
    %v1698 = vpack.c.bf16 %v1694, %v1694
    %v1699 = vpack.c.bf16 %v1695, %v1695
    %v1700 = vpack.c.bf16 %v1696, %v1696
    %v1701 = vld [vmem:[%s6] sm:$0xff]
    %v1702 = vld [vmem:[%s6 + $0x8] sm:$0xff]
    %v1703 = vld [vmem:[%s6 + $0x10] sm:$0xff]
    %v1704 = vld [vmem:[%s6 + $0x18] sm:$0xff]
    %v1705 = vld [vmem:[%s6 + $0x20] sm:$0xff]
    %v1706 = vld [vmem:[%s6 + $0x28] sm:$0xff]
    %v1707 = vld [vmem:[%s6 + $0x30] sm:$0xff]
    %v1708 = vld [vmem:[%s6 + $0x38] sm:$0xff]
    %v1709 = vld [vmem:[%s6 + $0x40] sm:$0xff]
    %v1710 = vld [vmem:[%s6 + $0x48] sm:$0xff]
    %v1711 = vld [vmem:[%s6 + $0x50] sm:$0xff]
    %v1712 = vld [vmem:[%s6 + $0x58] sm:$0xff]
    %v1713 = vld [vmem:[%s6 + $0x60] sm:$0xff]
    %v1714 = vld [vmem:[%s6 + $0x68] sm:$0xff]
    %v1715 = vld [vmem:[%s6 + $0x70] sm:$0xff]
    %v1716 = vld [vmem:[%s6 + $0x78] sm:$0xff]
    %v1717 = vld [vmem:[%s6 + $0x80] sm:$0xff]
    %v1718 = vld [vmem:[%s6 + $0x88] sm:$0xff]
    %v1719 = vld [vmem:[%s6 + $0x90] sm:$0xff]
    %v1720 = vld [vmem:[%s6 + $0x98] sm:$0xff]
    %v1721 = vld [vmem:[%s6 + $0xa0] sm:$0xff]
    %v1722 = vld [vmem:[%s6 + $0xa8] sm:$0xff]
    %v1723 = vld [vmem:[%s6 + $0xb0] sm:$0xff]
    %v1724 = vld [vmem:[%s6 + $0xb8] sm:$0xff]
    %v1725 = vld [vmem:[%s6 + $0xc0] sm:$0xff]
    %v1726 = vld [vmem:[%s6 + $0xc8] sm:$0xff]
    %v1727 = vld [vmem:[%s6 + $0xd0] sm:$0xff]
    %v1728 = vld [vmem:[%s6 + $0xd8] sm:$0xff]
    %v1729 = vld [vmem:[%s6 + $0xe0] sm:$0xff]
    %v1730 = vld [vmem:[%s6 + $0xe8] sm:$0xff]
    %v1731 = vld [vmem:[%s6 + $0xf0] sm:$0xff]
    %v1732 = vld [vmem:[%s6 + $0xf8] sm:$0xff]
    %v1733 = vld [vmem:[%s6 + $0x100] sm:$0xff]
    %v1734 = vld [vmem:[%s6 + $0x108] sm:$0xff]
    %v1735 = vld [vmem:[%s6 + $0x110] sm:$0xff]
    %v1736 = vld [vmem:[%s6 + $0x118] sm:$0xff]
    %v1737 = vld [vmem:[%s6 + $0x120] sm:$0xff]
    %v1738 = vld [vmem:[%s6 + $0x128] sm:$0xff]
    %v1739 = vld [vmem:[%s6 + $0x130] sm:$0xff]
    %v1740 = vld [vmem:[%s6 + $0x138] sm:$0xff]
    %v1741 = vld [vmem:[%s6 + $0x140] sm:$0xff]
    %v1742 = vld [vmem:[%s6 + $0x148] sm:$0xff]
    %v1743 = vld [vmem:[%s6 + $0x150] sm:$0xff]
    %v1744 = vld [vmem:[%s6 + $0x158] sm:$0xff]
    %v1745 = vld [vmem:[%s6 + $0x160] sm:$0xff]
    %v1746 = vld [vmem:[%s6 + $0x168] sm:$0xff]
    %v1747 = vld [vmem:[%s6 + $0x170] sm:$0xff]
    %v1748 = vld [vmem:[%s6 + $0x178] sm:$0xff]
    %v1749 = vld [vmem:[%s6 + $0x180] sm:$0xff]
    %v1750 = vld [vmem:[%s6 + $0x188] sm:$0xff]
    %v1751 = vld [vmem:[%s6 + $0x190] sm:$0xff]
    %v1752 = vld [vmem:[%s6 + $0x198] sm:$0xff]
    %v1753 = vld [vmem:[%s6 + $0x1a0] sm:$0xff]
    %v1754 = vld [vmem:[%s6 + $0x1a8] sm:$0xff]
    %v1755 = vld [vmem:[%s6 + $0x1b0] sm:$0xff]
    %v1756 = vld [vmem:[%s6 + $0x1b8] sm:$0xff]
    %v1757 = vld [vmem:[%s6 + $0x1c0] sm:$0xff]
    %v1758 = vld [vmem:[%s6 + $0x1c8] sm:$0xff]
    %v1759 = vld [vmem:[%s6 + $0x1d0] sm:$0xff]
    %v1760 = vld [vmem:[%s6 + $0x1d8] sm:$0xff]
    %v1761 = vld [vmem:[%s6 + $0x1e0] sm:$0xff]
    %v1762 = vld [vmem:[%s6 + $0x1e8] sm:$0xff]
    %v1763 = vld [vmem:[%s6 + $0x1f0] sm:$0xff]
    %v1764 = vld [vmem:[%s6 + $0x1f8] sm:$0xff]
    %v1765 = vld [vmem:[%s6 + $0x200] sm:$0xff]
    %v1766 = vld [vmem:[%s6 + $0x208] sm:$0xff]
    %v1767 = vld [vmem:[%s6 + $0x210] sm:$0xff]
    %v1768 = vld [vmem:[%s6 + $0x218] sm:$0xff]
    %v1769 = vld [vmem:[%s6 + $0x220] sm:$0xff]
    %v1770 = vld [vmem:[%s6 + $0x228] sm:$0xff]
    %v1771 = vld [vmem:[%s6 + $0x230] sm:$0xff]
    %v1772 = vld [vmem:[%s6 + $0x238] sm:$0xff]
    %v1773 = vld [vmem:[%s6 + $0x240] sm:$0xff]
    %v1774 = vld [vmem:[%s6 + $0x248] sm:$0xff]
    %v1775 = vld [vmem:[%s6 + $0x250] sm:$0xff]
    %v1776 = vld [vmem:[%s6 + $0x258] sm:$0xff]
    %v1777 = vld [vmem:[%s6 + $0x260] sm:$0xff]
    %v1778 = vld [vmem:[%s6 + $0x268] sm:$0xff]
    %v1779 = vld [vmem:[%s6 + $0x270] sm:$0xff]
    %v1780 = vld [vmem:[%s6 + $0x278] sm:$0xff]
    %v1781 = vld [vmem:[%s6 + $0x280] sm:$0xff]
    %v1782 = vld [vmem:[%s6 + $0x288] sm:$0xff]
    %v1783 = vld [vmem:[%s6 + $0x290] sm:$0xff]
    %v1784 = vld [vmem:[%s6 + $0x298] sm:$0xff]
    %v1785 = vld [vmem:[%s6 + $0x2a0] sm:$0xff]
    %v1786 = vld [vmem:[%s6 + $0x2a8] sm:$0xff]
    %v1787 = vld [vmem:[%s6 + $0x2b0] sm:$0xff]
    %v1788 = vld [vmem:[%s6 + $0x2b8] sm:$0xff]
    %v1789 = vld [vmem:[%s6 + $0x2c0] sm:$0xff]
    %v1790 = vld [vmem:[%s6 + $0x2c8] sm:$0xff]
    %v1791 = vld [vmem:[%s6 + $0x2d0] sm:$0xff]
    %v1792 = vld [vmem:[%s6 + $0x2d8] sm:$0xff]
    %v1793 = vld [vmem:[%s6 + $0x2e0] sm:$0xff]
    %v1794 = vld [vmem:[%s6 + $0x2e8] sm:$0xff]
    %v1795 = vld [vmem:[%s6 + $0x2f0] sm:$0xff]
    %v1796 = vld [vmem:[%s6 + $0x2f8] sm:$0xff]
    %v1797 = vld [vmem:[%s6 + $0x300] sm:$0xff]
    %v1798 = vld [vmem:[%s6 + $0x308] sm:$0xff]
    %v1799 = vld [vmem:[%s6 + $0x310] sm:$0xff]
    %v1800 = vld [vmem:[%s6 + $0x318] sm:$0xff]
    %v1801 = vld [vmem:[%s6 + $0x320] sm:$0xff]
    %v1802 = vld [vmem:[%s6 + $0x328] sm:$0xff]
    %v1803 = vld [vmem:[%s6 + $0x330] sm:$0xff]
    %v1804 = vld [vmem:[%s6 + $0x338] sm:$0xff]
    %v1805 = vld [vmem:[%s6 + $0x340] sm:$0xff]
    %v1806 = vld [vmem:[%s6 + $0x348] sm:$0xff]
    %v1807 = vld [vmem:[%s6 + $0x350] sm:$0xff]
    %v1808 = vld [vmem:[%s6 + $0x358] sm:$0xff]
    %v1809 = vld [vmem:[%s6 + $0x360] sm:$0xff]
    %v1810 = vld [vmem:[%s6 + $0x368] sm:$0xff]
    %v1811 = vld [vmem:[%s6 + $0x370] sm:$0xff]
    %v1812 = vld [vmem:[%s6 + $0x378] sm:$0xff]
    %v1813 = vld [vmem:[%s6 + $0x380] sm:$0xff]
    %v1814 = vld [vmem:[%s6 + $0x388] sm:$0xff]
    %v1815 = vld [vmem:[%s6 + $0x390] sm:$0xff]
    %v1816 = vld [vmem:[%s6 + $0x398] sm:$0xff]
    %v1817 = vld [vmem:[%s6 + $0x3a0] sm:$0xff]
    %v1818 = vld [vmem:[%s6 + $0x3a8] sm:$0xff]
    %v1819 = vld [vmem:[%s6 + $0x3b0] sm:$0xff]
    %v1820 = vld [vmem:[%s6 + $0x3b8] sm:$0xff]
    %v1821 = vld [vmem:[%s6 + $0x3c0] sm:$0xff]
    %v1822 = vld [vmem:[%s6 + $0x3c8] sm:$0xff]
    %v1823 = vld [vmem:[%s6 + $0x3d0] sm:$0xff]
    %v1824 = vld [vmem:[%s6 + $0x3d8] sm:$0xff]
    %v1825 = vld [vmem:[%s6 + $0x3e0] sm:$0xff]
    %v1826 = vld [vmem:[%s6 + $0x3e8] sm:$0xff]
    %v1827 = vld [vmem:[%s6 + $0x3f0] sm:$0xff]
    %v1828 = vld [vmem:[%s6 + $0x3f8] sm:$0xff]
    %v1829 = vld [vmem:[%s7] sm:$0xf]
    %v1831 = vlaneseq
    %v1832 = vshrl.u32 %v1831, 7
    %v1833 = vsub.s32 0, %v1832
    %v1834 = vrot.slane %v1829, %v1833
    %v1835 = vlaneseq
    %v1836 = vshrl.u32 %v1835, 7
    %v1837 = vsub.s32 1, %v1836
    %v1838 = vrot.slane %v1829, %v1837
    %v1839 = vlaneseq
    %v1840 = vshrl.u32 %v1839, 7
    %v1841 = vsub.s32 2, %v1840
    %v1842 = vrot.slane %v1829, %v1841
    %v1843 = vlaneseq
    %v1844 = vshrl.u32 %v1843, 7
    %v1845 = vsub.s32 3, %v1844
    %v1846 = vrot.slane %v1829, %v1845
    %v1979 = vunpack.c.l.b16 %v1701
    %v1980 = vunpack.c.h.b16 %v1701
    %v1981 = vunpack.c.l.b16 %v1702
    %v1982 = vunpack.c.h.b16 %v1702
    %v1983 = vunpack.c.l.b16 %v1703
    %v1984 = vunpack.c.h.b16 %v1703
    %v1985 = vunpack.c.l.b16 %v1704
    %v1986 = vunpack.c.h.b16 %v1704
    %v1987 = vunpack.c.l.b16 %v1705
    %v1988 = vunpack.c.h.b16 %v1705
    %v1989 = vunpack.c.l.b16 %v1706
    %v1990 = vunpack.c.h.b16 %v1706
    %v1991 = vunpack.c.l.b16 %v1707
    %v1992 = vunpack.c.h.b16 %v1707
    %v1993 = vunpack.c.l.b16 %v1708
    %v1994 = vunpack.c.h.b16 %v1708
    %v1995 = vunpack.c.l.b16 %v1709
    %v1996 = vunpack.c.h.b16 %v1709
    %v1997 = vunpack.c.l.b16 %v1710
    %v1998 = vunpack.c.h.b16 %v1710
    %v1999 = vunpack.c.l.b16 %v1711
    %v2000 = vunpack.c.h.b16 %v1711
    %v2001 = vunpack.c.l.b16 %v1712
    %v2002 = vunpack.c.h.b16 %v1712
    %v2003 = vunpack.c.l.b16 %v1713
    %v2004 = vunpack.c.h.b16 %v1713
    %v2005 = vunpack.c.l.b16 %v1714
    %v2006 = vunpack.c.h.b16 %v1714
    %v2007 = vunpack.c.l.b16 %v1715
    %v2008 = vunpack.c.h.b16 %v1715
    %v2009 = vunpack.c.l.b16 %v1716
    %v2010 = vunpack.c.h.b16 %v1716
    %v2011 = vunpack.c.l.b16 %v1717
    %v2012 = vunpack.c.h.b16 %v1717
    %v2013 = vunpack.c.l.b16 %v1718
    %v2014 = vunpack.c.h.b16 %v1718
    %v2015 = vunpack.c.l.b16 %v1719
    %v2016 = vunpack.c.h.b16 %v1719
    %v2017 = vunpack.c.l.b16 %v1720
    %v2018 = vunpack.c.h.b16 %v1720
    %v2019 = vunpack.c.l.b16 %v1721
    %v2020 = vunpack.c.h.b16 %v1721
    %v2021 = vunpack.c.l.b16 %v1722
    %v2022 = vunpack.c.h.b16 %v1722
    %v2023 = vunpack.c.l.b16 %v1723
    %v2024 = vunpack.c.h.b16 %v1723
    %v2025 = vunpack.c.l.b16 %v1724
    %v2026 = vunpack.c.h.b16 %v1724
    %v2027 = vunpack.c.l.b16 %v1725
    %v2028 = vunpack.c.h.b16 %v1725
    %v2029 = vunpack.c.l.b16 %v1726
    %v2030 = vunpack.c.h.b16 %v1726
    %v2031 = vunpack.c.l.b16 %v1727
    %v2032 = vunpack.c.h.b16 %v1727
    %v2033 = vunpack.c.l.b16 %v1728
    %v2034 = vunpack.c.h.b16 %v1728
    %v2035 = vunpack.c.l.b16 %v1729
    %v2036 = vunpack.c.h.b16 %v1729
    %v2037 = vunpack.c.l.b16 %v1730
    %v2038 = vunpack.c.h.b16 %v1730
    %v2039 = vunpack.c.l.b16 %v1731
    %v2040 = vunpack.c.h.b16 %v1731
    %v2041 = vunpack.c.l.b16 %v1732
    %v2042 = vunpack.c.h.b16 %v1732
    %v2043 = vunpack.c.l.b16 %v1733
    %v2044 = vunpack.c.h.b16 %v1733
    %v2045 = vunpack.c.l.b16 %v1734
    %v2046 = vunpack.c.h.b16 %v1734
    %v2047 = vunpack.c.l.b16 %v1735
    %v2048 = vunpack.c.h.b16 %v1735
    %v2049 = vunpack.c.l.b16 %v1736
    %v2050 = vunpack.c.h.b16 %v1736
    %v2051 = vunpack.c.l.b16 %v1737
    %v2052 = vunpack.c.h.b16 %v1737
    %v2053 = vunpack.c.l.b16 %v1738
    %v2054 = vunpack.c.h.b16 %v1738
    %v2055 = vunpack.c.l.b16 %v1739
    %v2056 = vunpack.c.h.b16 %v1739
    %v2057 = vunpack.c.l.b16 %v1740
    %v2058 = vunpack.c.h.b16 %v1740
    %v2059 = vunpack.c.l.b16 %v1741
    %v2060 = vunpack.c.h.b16 %v1741
    %v2061 = vunpack.c.l.b16 %v1742
    %v2062 = vunpack.c.h.b16 %v1742
    %v2063 = vunpack.c.l.b16 %v1743
    %v2064 = vunpack.c.h.b16 %v1743
    %v2065 = vunpack.c.l.b16 %v1744
    %v2066 = vunpack.c.h.b16 %v1744
    %v2067 = vunpack.c.l.b16 %v1745
    %v2068 = vunpack.c.h.b16 %v1745
    %v2069 = vunpack.c.l.b16 %v1746
    %v2070 = vunpack.c.h.b16 %v1746
    %v2071 = vunpack.c.l.b16 %v1747
    %v2072 = vunpack.c.h.b16 %v1747
    %v2073 = vunpack.c.l.b16 %v1748
    %v2074 = vunpack.c.h.b16 %v1748
    %v2075 = vunpack.c.l.b16 %v1749
    %v2076 = vunpack.c.h.b16 %v1749
    %v2077 = vunpack.c.l.b16 %v1750
    %v2078 = vunpack.c.h.b16 %v1750
    %v2079 = vunpack.c.l.b16 %v1751
    %v2080 = vunpack.c.h.b16 %v1751
    %v2081 = vunpack.c.l.b16 %v1752
    %v2082 = vunpack.c.h.b16 %v1752
    %v2083 = vunpack.c.l.b16 %v1753
    %v2084 = vunpack.c.h.b16 %v1753
    %v2085 = vunpack.c.l.b16 %v1754
    %v2086 = vunpack.c.h.b16 %v1754
    %v2087 = vunpack.c.l.b16 %v1755
    %v2088 = vunpack.c.h.b16 %v1755
    %v2089 = vunpack.c.l.b16 %v1756
    %v2090 = vunpack.c.h.b16 %v1756
    %v2091 = vunpack.c.l.b16 %v1757
    %v2092 = vunpack.c.h.b16 %v1757
    %v2093 = vunpack.c.l.b16 %v1758
    %v2094 = vunpack.c.h.b16 %v1758
    %v2095 = vunpack.c.l.b16 %v1759
    %v2096 = vunpack.c.h.b16 %v1759
    %v2097 = vunpack.c.l.b16 %v1760
    %v2098 = vunpack.c.h.b16 %v1760
    %v2099 = vunpack.c.l.b16 %v1761
    %v2100 = vunpack.c.h.b16 %v1761
    %v2101 = vunpack.c.l.b16 %v1762
    %v2102 = vunpack.c.h.b16 %v1762
    %v2103 = vunpack.c.l.b16 %v1763
    %v2104 = vunpack.c.h.b16 %v1763
    %v2105 = vunpack.c.l.b16 %v1764
    %v2106 = vunpack.c.h.b16 %v1764
    %v2107 = vunpack.c.l.b16 %v1765
    %v2108 = vunpack.c.h.b16 %v1765
    %v2109 = vunpack.c.l.b16 %v1766
    %v2110 = vunpack.c.h.b16 %v1766
    %v2111 = vunpack.c.l.b16 %v1767
    %v2112 = vunpack.c.h.b16 %v1767
    %v2113 = vunpack.c.l.b16 %v1768
    %v2114 = vunpack.c.h.b16 %v1768
    %v2115 = vunpack.c.l.b16 %v1769
    %v2116 = vunpack.c.h.b16 %v1769
    %v2117 = vunpack.c.l.b16 %v1770
    %v2118 = vunpack.c.h.b16 %v1770
    %v2119 = vunpack.c.l.b16 %v1771
    %v2120 = vunpack.c.h.b16 %v1771
    %v2121 = vunpack.c.l.b16 %v1772
    %v2122 = vunpack.c.h.b16 %v1772
    %v2123 = vunpack.c.l.b16 %v1773
    %v2124 = vunpack.c.h.b16 %v1773
    %v2125 = vunpack.c.l.b16 %v1774
    %v2126 = vunpack.c.h.b16 %v1774
    %v2127 = vunpack.c.l.b16 %v1775
    %v2128 = vunpack.c.h.b16 %v1775
    %v2129 = vunpack.c.l.b16 %v1776
    %v2130 = vunpack.c.h.b16 %v1776
    %v2131 = vunpack.c.l.b16 %v1777
    %v2132 = vunpack.c.h.b16 %v1777
    %v2133 = vunpack.c.l.b16 %v1778
    %v2134 = vunpack.c.h.b16 %v1778
    %v2135 = vunpack.c.l.b16 %v1779
    %v2136 = vunpack.c.h.b16 %v1779
    %v2137 = vunpack.c.l.b16 %v1780
    %v2138 = vunpack.c.h.b16 %v1780
    %v2139 = vunpack.c.l.b16 %v1781
    %v2140 = vunpack.c.h.b16 %v1781
    %v2141 = vunpack.c.l.b16 %v1782
    %v2142 = vunpack.c.h.b16 %v1782
    %v2143 = vunpack.c.l.b16 %v1783
    %v2144 = vunpack.c.h.b16 %v1783
    %v2145 = vunpack.c.l.b16 %v1784
    %v2146 = vunpack.c.h.b16 %v1784
    %v2147 = vunpack.c.l.b16 %v1785
    %v2148 = vunpack.c.h.b16 %v1785
    %v2149 = vunpack.c.l.b16 %v1786
    %v2150 = vunpack.c.h.b16 %v1786
    %v2151 = vunpack.c.l.b16 %v1787
    %v2152 = vunpack.c.h.b16 %v1787
    %v2153 = vunpack.c.l.b16 %v1788
    %v2154 = vunpack.c.h.b16 %v1788
    %v2155 = vunpack.c.l.b16 %v1789
    %v2156 = vunpack.c.h.b16 %v1789
    %v2157 = vunpack.c.l.b16 %v1790
    %v2158 = vunpack.c.h.b16 %v1790
    %v2159 = vunpack.c.l.b16 %v1791
    %v2160 = vunpack.c.h.b16 %v1791
    %v2161 = vunpack.c.l.b16 %v1792
    %v2162 = vunpack.c.h.b16 %v1792
    %v2163 = vunpack.c.l.b16 %v1793
    %v2164 = vunpack.c.h.b16 %v1793
    %v2165 = vunpack.c.l.b16 %v1794
    %v2166 = vunpack.c.h.b16 %v1794
    %v2167 = vunpack.c.l.b16 %v1795
    %v2168 = vunpack.c.h.b16 %v1795
    %v2169 = vunpack.c.l.b16 %v1796
    %v2170 = vunpack.c.h.b16 %v1796
    %v2171 = vunpack.c.l.b16 %v1797
    %v2172 = vunpack.c.h.b16 %v1797
    %v2173 = vunpack.c.l.b16 %v1798
    %v2174 = vunpack.c.h.b16 %v1798
    %v2175 = vunpack.c.l.b16 %v1799
    %v2176 = vunpack.c.h.b16 %v1799
    %v2177 = vunpack.c.l.b16 %v1800
    %v2178 = vunpack.c.h.b16 %v1800
    %v2179 = vunpack.c.l.b16 %v1801
    %v2180 = vunpack.c.h.b16 %v1801
    %v2181 = vunpack.c.l.b16 %v1802
    %v2182 = vunpack.c.h.b16 %v1802
    %v2183 = vunpack.c.l.b16 %v1803
    %v2184 = vunpack.c.h.b16 %v1803
    %v2185 = vunpack.c.l.b16 %v1804
    %v2186 = vunpack.c.h.b16 %v1804
    %v2187 = vunpack.c.l.b16 %v1805
    %v2188 = vunpack.c.h.b16 %v1805
    %v2189 = vunpack.c.l.b16 %v1806
    %v2190 = vunpack.c.h.b16 %v1806
    %v2191 = vunpack.c.l.b16 %v1807
    %v2192 = vunpack.c.h.b16 %v1807
    %v2193 = vunpack.c.l.b16 %v1808
    %v2194 = vunpack.c.h.b16 %v1808
    %v2195 = vunpack.c.l.b16 %v1809
    %v2196 = vunpack.c.h.b16 %v1809
    %v2197 = vunpack.c.l.b16 %v1810
    %v2198 = vunpack.c.h.b16 %v1810
    %v2199 = vunpack.c.l.b16 %v1811
    %v2200 = vunpack.c.h.b16 %v1811
    %v2201 = vunpack.c.l.b16 %v1812
    %v2202 = vunpack.c.h.b16 %v1812
    %v2203 = vunpack.c.l.b16 %v1813
    %v2204 = vunpack.c.h.b16 %v1813
    %v2205 = vunpack.c.l.b16 %v1814
    %v2206 = vunpack.c.h.b16 %v1814
    %v2207 = vunpack.c.l.b16 %v1815
    %v2208 = vunpack.c.h.b16 %v1815
    %v2209 = vunpack.c.l.b16 %v1816
    %v2210 = vunpack.c.h.b16 %v1816
    %v2211 = vunpack.c.l.b16 %v1817
    %v2212 = vunpack.c.h.b16 %v1817
    %v2213 = vunpack.c.l.b16 %v1818
    %v2214 = vunpack.c.h.b16 %v1818
    %v2215 = vunpack.c.l.b16 %v1819
    %v2216 = vunpack.c.h.b16 %v1819
    %v2217 = vunpack.c.l.b16 %v1820
    %v2218 = vunpack.c.h.b16 %v1820
    %v2219 = vunpack.c.l.b16 %v1821
    %v2220 = vunpack.c.h.b16 %v1821
    %v2221 = vunpack.c.l.b16 %v1822
    %v2222 = vunpack.c.h.b16 %v1822
    %v2223 = vunpack.c.l.b16 %v1823
    %v2224 = vunpack.c.h.b16 %v1823
    %v2225 = vunpack.c.l.b16 %v1824
    %v2226 = vunpack.c.h.b16 %v1824
    %v2227 = vunpack.c.l.b16 %v1825
    %v2228 = vunpack.c.h.b16 %v1825
    %v2229 = vunpack.c.l.b16 %v1826
    %v2230 = vunpack.c.h.b16 %v1826
    %v2231 = vunpack.c.l.b16 %v1827
    %v2232 = vunpack.c.h.b16 %v1827
    %v2233 = vunpack.c.l.b16 %v1828
    %v2234 = vunpack.c.h.b16 %v1828
    %v2235 = vpack.c.b16 %v1983, %v1979
    %v2236 = vpack.c.b16 %v1984, %v1980
    %v2237 = vpack.c.b16 %v1985, %v1981
    %v2238 = vpack.c.b16 %v1986, %v1982
    %v2239 = vpack.c.b16 %v1991, %v1987
    %v2240 = vpack.c.b16 %v1992, %v1988
    %v2241 = vpack.c.b16 %v1993, %v1989
    %v2242 = vpack.c.b16 %v1994, %v1990
    %v2243 = vpack.c.b16 %v1999, %v1995
    %v2244 = vpack.c.b16 %v2000, %v1996
    %v2245 = vpack.c.b16 %v2001, %v1997
    %v2246 = vpack.c.b16 %v2002, %v1998
    %v2247 = vpack.c.b16 %v2007, %v2003
    %v2248 = vpack.c.b16 %v2008, %v2004
    %v2249 = vpack.c.b16 %v2009, %v2005
    %v2250 = vpack.c.b16 %v2010, %v2006
    %v2251 = vpack.c.b16 %v2015, %v2011
    %v2252 = vpack.c.b16 %v2016, %v2012
    %v2253 = vpack.c.b16 %v2017, %v2013
    %v2254 = vpack.c.b16 %v2018, %v2014
    %v2255 = vpack.c.b16 %v2023, %v2019
    %v2256 = vpack.c.b16 %v2024, %v2020
    %v2257 = vpack.c.b16 %v2025, %v2021
    %v2258 = vpack.c.b16 %v2026, %v2022
    %v2259 = vpack.c.b16 %v2031, %v2027
    %v2260 = vpack.c.b16 %v2032, %v2028
    %v2261 = vpack.c.b16 %v2033, %v2029
    %v2262 = vpack.c.b16 %v2034, %v2030
    %v2263 = vpack.c.b16 %v2039, %v2035
    %v2264 = vpack.c.b16 %v2040, %v2036
    %v2265 = vpack.c.b16 %v2041, %v2037
    %v2266 = vpack.c.b16 %v2042, %v2038
    %v2267 = vpack.c.b16 %v2047, %v2043
    %v2268 = vpack.c.b16 %v2048, %v2044
    %v2269 = vpack.c.b16 %v2049, %v2045
    %v2270 = vpack.c.b16 %v2050, %v2046
    %v2271 = vpack.c.b16 %v2055, %v2051
    %v2272 = vpack.c.b16 %v2056, %v2052
    %v2273 = vpack.c.b16 %v2057, %v2053
    %v2274 = vpack.c.b16 %v2058, %v2054
    %v2275 = vpack.c.b16 %v2063, %v2059
    %v2276 = vpack.c.b16 %v2064, %v2060
    %v2277 = vpack.c.b16 %v2065, %v2061
    %v2278 = vpack.c.b16 %v2066, %v2062
    %v2279 = vpack.c.b16 %v2071, %v2067
    %v2280 = vpack.c.b16 %v2072, %v2068
    %v2281 = vpack.c.b16 %v2073, %v2069
    %v2282 = vpack.c.b16 %v2074, %v2070
    %v2283 = vpack.c.b16 %v2079, %v2075
    %v2284 = vpack.c.b16 %v2080, %v2076
    %v2285 = vpack.c.b16 %v2081, %v2077
    %v2286 = vpack.c.b16 %v2082, %v2078
    %v2287 = vpack.c.b16 %v2087, %v2083
    %v2288 = vpack.c.b16 %v2088, %v2084
    %v2289 = vpack.c.b16 %v2089, %v2085
    %v2290 = vpack.c.b16 %v2090, %v2086
    %v2291 = vpack.c.b16 %v2095, %v2091
    %v2292 = vpack.c.b16 %v2096, %v2092
    %v2293 = vpack.c.b16 %v2097, %v2093
    %v2294 = vpack.c.b16 %v2098, %v2094
    %v2295 = vpack.c.b16 %v2103, %v2099
    %v2296 = vpack.c.b16 %v2104, %v2100
    %v2297 = vpack.c.b16 %v2105, %v2101
    %v2298 = vpack.c.b16 %v2106, %v2102
    %v2299 = vpack.c.b16 %v2111, %v2107
    %v2300 = vpack.c.b16 %v2112, %v2108
    %v2301 = vpack.c.b16 %v2113, %v2109
    %v2302 = vpack.c.b16 %v2114, %v2110
    %v2303 = vpack.c.b16 %v2119, %v2115
    %v2304 = vpack.c.b16 %v2120, %v2116
    %v2305 = vpack.c.b16 %v2121, %v2117
    %v2306 = vpack.c.b16 %v2122, %v2118
    %v2307 = vpack.c.b16 %v2127, %v2123
    %v2308 = vpack.c.b16 %v2128, %v2124
    %v2309 = vpack.c.b16 %v2129, %v2125
    %v2310 = vpack.c.b16 %v2130, %v2126
    %v2311 = vpack.c.b16 %v2135, %v2131
    %v2312 = vpack.c.b16 %v2136, %v2132
    %v2313 = vpack.c.b16 %v2137, %v2133
    %v2314 = vpack.c.b16 %v2138, %v2134
    %v2315 = vpack.c.b16 %v2143, %v2139
    %v2316 = vpack.c.b16 %v2144, %v2140
    %v2317 = vpack.c.b16 %v2145, %v2141
    %v2318 = vpack.c.b16 %v2146, %v2142
    %v2319 = vpack.c.b16 %v2151, %v2147
    %v2320 = vpack.c.b16 %v2152, %v2148
    %v2321 = vpack.c.b16 %v2153, %v2149
    %v2322 = vpack.c.b16 %v2154, %v2150
    %v2323 = vpack.c.b16 %v2159, %v2155
    %v2324 = vpack.c.b16 %v2160, %v2156
    %v2325 = vpack.c.b16 %v2161, %v2157
    %v2326 = vpack.c.b16 %v2162, %v2158
    %v2327 = vpack.c.b16 %v2167, %v2163
    %v2328 = vpack.c.b16 %v2168, %v2164
    %v2329 = vpack.c.b16 %v2169, %v2165
    %v2330 = vpack.c.b16 %v2170, %v2166
    %v2331 = vpack.c.b16 %v2175, %v2171
    %v2332 = vpack.c.b16 %v2176, %v2172
    %v2333 = vpack.c.b16 %v2177, %v2173
    %v2334 = vpack.c.b16 %v2178, %v2174
    %v2335 = vpack.c.b16 %v2183, %v2179
    %v2336 = vpack.c.b16 %v2184, %v2180
    %v2337 = vpack.c.b16 %v2185, %v2181
    %v2338 = vpack.c.b16 %v2186, %v2182
    %v2339 = vpack.c.b16 %v2191, %v2187
    %v2340 = vpack.c.b16 %v2192, %v2188
    %v2341 = vpack.c.b16 %v2193, %v2189
    %v2342 = vpack.c.b16 %v2194, %v2190
    %v2343 = vpack.c.b16 %v2199, %v2195
    %v2344 = vpack.c.b16 %v2200, %v2196
    %v2345 = vpack.c.b16 %v2201, %v2197
    %v2346 = vpack.c.b16 %v2202, %v2198
    %v2347 = vpack.c.b16 %v2207, %v2203
    %v2348 = vpack.c.b16 %v2208, %v2204
    %v2349 = vpack.c.b16 %v2209, %v2205
    %v2350 = vpack.c.b16 %v2210, %v2206
    %v2351 = vpack.c.b16 %v2215, %v2211
    %v2352 = vpack.c.b16 %v2216, %v2212
    %v2353 = vpack.c.b16 %v2217, %v2213
    %v2354 = vpack.c.b16 %v2218, %v2214
    %v2355 = vpack.c.b16 %v2223, %v2219
    %v2356 = vpack.c.b16 %v2224, %v2220
    %v2357 = vpack.c.b16 %v2225, %v2221
    %v2358 = vpack.c.b16 %v2226, %v2222
    %v2359 = vpack.c.b16 %v2231, %v2227
    %v2360 = vpack.c.b16 %v2232, %v2228
    %v2361 = vpack.c.b16 %v2233, %v2229
    %v2362 = vpack.c.b16 %v2234, %v2230
    %2491 = vmatprep.subr.bf16.mxu0 %v2264
    %2492 = vmatpush1.bf16.msra.mxu0 %v2263
    %2493 = vmatprep.subr.bf16.mxu0 %v2260
    %2494 = vmatpush1.bf16.msra.mxu0 %v2259
    %2495 = vmatprep.subr.bf16.mxu0 %v2256
    %2496 = vmatpush1.bf16.msra.mxu0 %v2255
    %2497 = vmatprep.subr.bf16.mxu0 %v2252
    %2498 = vmatpush1.bf16.msra.mxu0 %v2251
    %2499 = vmatprep.subr.bf16.mxu0 %v2248
    %2500 = vmatpush1.bf16.msra.mxu0 %v2247
    %2501 = vmatprep.subr.bf16.mxu0 %v2244
    %2502 = vmatpush1.bf16.msra.mxu0 %v2243
    %2503 = vmatprep.subr.bf16.mxu0 %v2240
    %2504 = vmatpush1.bf16.msra.mxu0 %v2239
    %2505 = vmatprep.subr.bf16.mxu0 %v2236
    %2506 = vmatpush1.bf16.msra.mxu0 %v2235
    %2507 = vmatprep.subr.bf16.mxu0 %v2296
    %2508 = vmatpush2.bf16.msra.mxu0 %v2295
    %2509 = vmatprep.subr.bf16.mxu0 %v2292
    %2510 = vmatpush2.bf16.msra.mxu0 %v2291
    %2511 = vmatprep.subr.bf16.mxu0 %v2288
    %2512 = vmatpush2.bf16.msra.mxu0 %v2287
    %2513 = vmatprep.subr.bf16.mxu0 %v2284
    %2514 = vmatpush2.bf16.msra.mxu0 %v2283
    %2515 = vmatprep.subr.bf16.mxu0 %v2280
    %2516 = vmatpush2.bf16.msra.mxu0 %v2279
    %2517 = vmatprep.subr.bf16.mxu0 %v2276
    %2518 = vmatpush2.bf16.msra.mxu0 %v2275
    %2519 = vmatprep.subr.bf16.mxu0 %v2272
    %2520 = vmatpush2.bf16.msra.mxu0 %v2271
    %2521 = vmatprep.subr.bf16.mxu0 %v2268
    %2522 = vmatpush2.bf16.msra.mxu0 %v2267
    %2523 = vmatprep.mubr.bf16.mxu0 %v1698
    %2524 = vmatmul.mubr.bf16.gmra.mxu0 %v1697
    %v2525 = vpop.f32.mrf.mxu0
    %v2526 = vadd.f32 %v1834, %v2525
    %v2527 = vpop.f32.mrf.mxu0
    %v2528 = vadd.f32 %v1838, %v2527
    %v2529 = vpop.f32.mrf.mxu0
    %v2530 = vpop.f32.mrf.mxu0
    %2531 = vdwg.mxu0
    %2532 = vmatprep.subr.bf16.mxu0 %v2328
    %2533 = vmatpush1.bf16.msra.mxu0 %v2327
    %2534 = vmatprep.subr.bf16.mxu0 %v2324
    %2535 = vmatpush1.bf16.msra.mxu0 %v2323
    %2536 = vmatprep.subr.bf16.mxu0 %v2320
    %2537 = vmatpush1.bf16.msra.mxu0 %v2319
    %2538 = vmatprep.subr.bf16.mxu0 %v2316
    %2539 = vmatpush1.bf16.msra.mxu0 %v2315
    %2540 = vmatprep.subr.bf16.mxu0 %v2312
    %2541 = vmatpush1.bf16.msra.mxu0 %v2311
    %2542 = vmatprep.subr.bf16.mxu0 %v2308
    %2543 = vmatpush1.bf16.msra.mxu0 %v2307
    %2544 = vmatprep.subr.bf16.mxu0 %v2304
    %2545 = vmatpush1.bf16.msra.mxu0 %v2303
    %2546 = vmatprep.subr.bf16.mxu0 %v2300
    %2547 = vmatpush1.bf16.msra.mxu0 %v2299
    %2548 = vmatprep.subr.bf16.mxu0 %v2360
    %2549 = vmatpush2.bf16.msra.mxu0 %v2359
    %2550 = vmatprep.subr.bf16.mxu0 %v2356
    %2551 = vmatpush2.bf16.msra.mxu0 %v2355
    %2552 = vmatprep.subr.bf16.mxu0 %v2352
    %2553 = vmatpush2.bf16.msra.mxu0 %v2351
    %2554 = vmatprep.subr.bf16.mxu0 %v2348
    %2555 = vmatpush2.bf16.msra.mxu0 %v2347
    %2556 = vmatprep.subr.bf16.mxu0 %v2344
    %2557 = vmatpush2.bf16.msra.mxu0 %v2343
    %2558 = vmatprep.subr.bf16.mxu0 %v2340
    %2559 = vmatpush2.bf16.msra.mxu0 %v2339
    %2560 = vmatprep.subr.bf16.mxu0 %v2336
    %2561 = vmatpush2.bf16.msra.mxu0 %v2335
    %2562 = vmatprep.subr.bf16.mxu0 %v2332
    %2563 = vmatpush2.bf16.msra.mxu0 %v2331
    %2564 = vmatprep.mubr.bf16.mxu0 %v1700
    %2565 = vmatmul.mubr.bf16.gmra.mxu0 %v1699
    %v2566 = vpop.f32.mrf.mxu0
    %v2567 = vadd.f32 %v2526, %v2566
    %v2568 = vpop.f32.mrf.mxu0
    %v2569 = vadd.f32 %v2528, %v2568
    %v2570 = vpop.f32.mrf.mxu0
    %v2571 = vpop.f32.mrf.mxu0
    %2572 = vdwg.mxu0
    %2573 = vmatprep.subr.bf16.mxu0 %v2266
    %2574 = vmatpush1.bf16.msra.mxu0 %v2265
    %2575 = vmatprep.subr.bf16.mxu0 %v2262
    %2576 = vmatpush1.bf16.msra.mxu0 %v2261
    %2577 = vmatprep.subr.bf16.mxu0 %v2258
    %2578 = vmatpush1.bf16.msra.mxu0 %v2257
    %2579 = vmatprep.subr.bf16.mxu0 %v2254
    %2580 = vmatpush1.bf16.msra.mxu0 %v2253
    %2581 = vmatprep.subr.bf16.mxu0 %v2250
    %2582 = vmatpush1.bf16.msra.mxu0 %v2249
    %2583 = vmatprep.subr.bf16.mxu0 %v2246
    %2584 = vmatpush1.bf16.msra.mxu0 %v2245
    %2585 = vmatprep.subr.bf16.mxu0 %v2242
    %2586 = vmatpush1.bf16.msra.mxu0 %v2241
    %2587 = vmatprep.subr.bf16.mxu0 %v2238
    %2588 = vmatpush1.bf16.msra.mxu0 %v2237
    %2589 = vmatprep.subr.bf16.mxu0 %v2298
    %2590 = vmatpush2.bf16.msra.mxu0 %v2297
    %2591 = vmatprep.subr.bf16.mxu0 %v2294
    %2592 = vmatpush2.bf16.msra.mxu0 %v2293
    %2593 = vmatprep.subr.bf16.mxu0 %v2290
    %2594 = vmatpush2.bf16.msra.mxu0 %v2289
    %2595 = vmatprep.subr.bf16.mxu0 %v2286
    %2596 = vmatpush2.bf16.msra.mxu0 %v2285
    %2597 = vmatprep.subr.bf16.mxu0 %v2282
    %2598 = vmatpush2.bf16.msra.mxu0 %v2281
    %2599 = vmatprep.subr.bf16.mxu0 %v2278
    %2600 = vmatpush2.bf16.msra.mxu0 %v2277
    %2601 = vmatprep.subr.bf16.mxu0 %v2274
    %2602 = vmatpush2.bf16.msra.mxu0 %v2273
    %2603 = vmatprep.subr.bf16.mxu0 %v2270
    %2604 = vmatpush2.bf16.msra.mxu0 %v2269
    %2605 = vmatprep.mubr.bf16.mxu0 %v1698
    %2606 = vmatmul.mubr.bf16.gmra.mxu0 %v1697
    %v2607 = vpop.f32.mrf.mxu0
    %v2608 = vadd.f32 %v1842, %v2607
    %v2609 = vpop.f32.mrf.mxu0
    %v2610 = vadd.f32 %v1846, %v2609
    %v2611 = vpop.f32.mrf.mxu0
    %v2612 = vpop.f32.mrf.mxu0
    %2613 = vdwg.mxu0
    %2614 = vmatprep.subr.bf16.mxu0 %v2330
    %2615 = vmatpush1.bf16.msra.mxu0 %v2329
    %2616 = vmatprep.subr.bf16.mxu0 %v2326
    %2617 = vmatpush1.bf16.msra.mxu0 %v2325
    %2618 = vmatprep.subr.bf16.mxu0 %v2322
    %2619 = vmatpush1.bf16.msra.mxu0 %v2321
    %2620 = vmatprep.subr.bf16.mxu0 %v2318
    %2621 = vmatpush1.bf16.msra.mxu0 %v2317
    %2622 = vmatprep.subr.bf16.mxu0 %v2314
    %2623 = vmatpush1.bf16.msra.mxu0 %v2313
    %2624 = vmatprep.subr.bf16.mxu0 %v2310
    %2625 = vmatpush1.bf16.msra.mxu0 %v2309
    %2626 = vmatprep.subr.bf16.mxu0 %v2306
    %2627 = vmatpush1.bf16.msra.mxu0 %v2305
    %2628 = vmatprep.subr.bf16.mxu0 %v2302
    %2629 = vmatpush1.bf16.msra.mxu0 %v2301
    %2630 = vmatprep.subr.bf16.mxu0 %v2362
    %2631 = vmatpush2.bf16.msra.mxu0 %v2361
    %2632 = vmatprep.subr.bf16.mxu0 %v2358
    %2633 = vmatpush2.bf16.msra.mxu0 %v2357
    %2634 = vmatprep.subr.bf16.mxu0 %v2354
    %2635 = vmatpush2.bf16.msra.mxu0 %v2353
    %2636 = vmatprep.subr.bf16.mxu0 %v2350
    %2637 = vmatpush2.bf16.msra.mxu0 %v2349
    %2638 = vmatprep.subr.bf16.mxu0 %v2346
    %2639 = vmatpush2.bf16.msra.mxu0 %v2345
    %2640 = vmatprep.subr.bf16.mxu0 %v2342
    %2641 = vmatpush2.bf16.msra.mxu0 %v2341
    %2642 = vmatprep.subr.bf16.mxu0 %v2338
    %2643 = vmatpush2.bf16.msra.mxu0 %v2337
    %2644 = vmatprep.subr.bf16.mxu0 %v2334
    %2645 = vmatpush2.bf16.msra.mxu0 %v2333
    %2646 = vmatprep.mubr.bf16.mxu0 %v1700
    %2647 = vmatmul.mubr.bf16.gmra.mxu0 %v1699
    %v2648 = vpop.f32.mrf.mxu0
    %v2649 = vadd.f32 %v2608, %v2648
    %v2650 = vpop.f32.mrf.mxu0
    %v2651 = vadd.f32 %v2610, %v2650
    %v2652 = vpop.f32.mrf.mxu0
    %v2653 = vpop.f32.mrf.mxu0
    %2654 = vdwg.mxu0
    %v2659 = vcombine.low %v2567, %v2569
    %v2660 = vcombine.low %v2649, %v2651
    %v2662 = vunpack.c.l.s4 1983009808
    %v2663 = vunpack.c.0.s8 %v2662
    %v2664 = vlaneseq
    %v2665 = vshrl.u32 %v2664, 7
    %v2666 = vsub.s32 %v2663, %v2665
    %v2667 = vrot.slane %v2659, %v2666
    %v2669 = vunpack.c.l.s4 1983009808
    %v2670 = vunpack.c.0.s8 %v2669
    %v2671 = vlaneseq
    %v2672 = vshrl.u32 %v2671, 7
    %v2673 = vsub.s32 %v2670, %v2672
    %v2674 = vrot.slane %v2660, %v2673
    %v2675 = vcombine.low %v2667, %v2674
    %2677 = vst [vmem:[#allocation4] sm:$0xff] %v2675
    // Predicated region
    $region34: #{vicreg_forward.1} parent=1 // pred_check
      _
    $region35: #{vicreg_forward.1} parent=1 // pred_check_branch
      %2679 = sbr.rel (0) target = $region37
    $region36: #{vicreg_forward.1} parent=1 // pred_region
      %s2681 = ssub.s32 64, 64
      %2682 = vsyncadd [#allocation3], %s2681
      %s2684 = sshll.u32 [#allocation2], 4
      %s2685 = int_to_ptr.vmem [resolvable:$true] %s2684
      %2687 = dma.vmem_to_hbm [thread:$0]  %s2685, 64, %s8, [#allocation3]
    $region37: #{vicreg_forward.1} parent=1 // pred_fallthru
      _
    // Predicated region
    $region38: #{vicreg_forward.1} parent=1 // pred_check
      _
    $region39: #{vicreg_forward.1} parent=1 // pred_check_branch
      %2689 = sbr.rel (0) target = $region41
    $region40: #{vicreg_forward.1} parent=1 // pred_region
      %s2691 = ssub.s32 128, 128
      %2692 = vsyncadd [#allocation5], %s2691
      %s2694 = sshll.u32 [#allocation4], 4
      %s2695 = int_to_ptr.vmem [resolvable:$true] %s2694
      %2697 = dma.vmem_to_hbm [thread:$0]  %s2695, 128, %s9, [#allocation5]
    $region41: #{vicreg_forward.1} parent=1 // pred_fallthru
      _
    // Predicated region
    $region42: #{vicreg_forward.1} parent=1 // pred_check
      _
    $region43: #{vicreg_forward.1} parent=1 // pred_check_branch
      %2699 = sbr.rel (0) target = $region45
    $region44: #{vicreg_forward.1} parent=1 // pred_region
      %2700 = dma.done [#allocation3], 64
    $region45: #{vicreg_forward.1} parent=1 // pred_fallthru
      _
    // Predicated region
    $region46: #{vicreg_forward.1} parent=1 // pred_check
      _
    $region47: #{vicreg_forward.1} parent=1 // pred_check_branch
      %2702 = sbr.rel (0) target = $region49
    $region48: #{vicreg_forward.1} parent=1 // pred_region
      %2703 = dma.done [#allocation5], 128
    $region49: #{vicreg_forward.1} parent=1 // pred_fallthru
      _
    %2704 = vsyncpa [#allocation3], 1
    %2705 = vsyncpa [#allocation5], 1

</llo_original>
